<compile_context>
chip_gen: v5e
topology: v5e:2x2
jax: 0.10.0
libtpu: 0.0.40
codegen_flags: <defaults>
</compile_context>

<pallas_src>
import jax
import jax.numpy as jnp
from jax.experimental import pallas as pl
from jax.experimental.pallas import tpu as pltpu

D_MODEL = 32
D_FF = 4 * D_MODEL            # 128 -> exactly one 128-lane tile
N_HEADS = 4
HEAD_DIM = D_MODEL // N_HEADS
SCALE = 1.0 / (HEAD_DIM ** 0.5)
LN_EPS = 1e-5
NEG_INF = -1e30               # exp(NEG_INF - m) == 0.0 exactly in f32
# Flip to jnp.bfloat16 for 2x MXU density + half HBM traffic (f32 accumulation
# kept); default f32 to match the PyTorch reference numerics exactly.
MATMUL_DTYPE = jnp.float32


def _layer_norm(x, g, b):
    mu = jnp.mean(x, axis=-1, keepdims=True)
    var = jnp.mean((x - mu) ** 2, axis=-1, keepdims=True)
    return (x - mu) * jax.lax.rsqrt(var + LN_EPS) * g + b


# ------------------------------ fused kernel -------------------------------

def _gtb_kernel(x_ref, g1_ref, b1_ref, wqkv_ref, bqkv_ref, wo_ref, bo_ref,
                g2_ref, b2_ref, w12_ref, b12_ref, w3_ref, b3_ref, o_ref):
    bt, s, d = x_ref.shape
    # leading-dim collapse only (last dim unchanged) -> layout-preserving
    x = x_ref[...].astype(jnp.float32).reshape(bt * s, d)

    # ---- LayerNorm 1 ----
    xn = _layer_norm(x, g1_ref[...], b1_ref[...])

    # ---- fused QKV projection: one (Bt*S, D) @ (D, 3D) MXU pass ----
    # SCALE is already folded into the Q columns of wqkv / bqkv (wrapper).
    qkv = jnp.dot(xn.astype(MATMUL_DTYPE), wqkv_ref[...].astype(MATMUL_DTYPE),
                  preferred_element_type=jnp.float32) + bqkv_ref[...]

    # ---- causal multi-head self-attention (TriangularCausalMask) ----
    row = jax.lax.broadcasted_iota(jnp.int32, (s, s), 0)
    col = jax.lax.broadcasted_iota(jnp.int32, (s, s), 1)
    neg_mask = jnp.where(col > row, jnp.float32(NEG_INF), jnp.float32(0.0))

    # Static 4-way head unroll; every head processes ALL Bt batches with one
    # batched einsum.  Out-projection applied per-head (8-row slice of Wo) and
    # summed == concat(heads) @ Wo, without the lane-concat relayout.
    attn_proj = jnp.zeros((bt * s, d), jnp.float32)
    for h in range(N_HEADS):
        q0 = 0 * D_MODEL + h * HEAD_DIM
        k0 = 1 * D_MODEL + h * HEAD_DIM
        v0 = 2 * D_MODEL + h * HEAD_DIM
        qh = qkv[:, q0:q0 + HEAD_DIM].reshape(bt, s, HEAD_DIM)
        kh = qkv[:, k0:k0 + HEAD_DIM].reshape(bt, s, HEAD_DIM)
        vh = qkv[:, v0:v0 + HEAD_DIM].reshape(bt, s, HEAD_DIM)

        sc = jnp.einsum('bqd,bkd->bqk',
                        qh.astype(MATMUL_DTYPE), kh.astype(MATMUL_DTYPE),
                        preferred_element_type=jnp.float32) + neg_mask
        m = jnp.max(sc, axis=-1, keepdims=True)           # diagonal always unmasked
        p = jnp.exp(sc - m)
        p = p * pl.reciprocal(jnp.sum(p, axis=-1, keepdims=True), approx=True)
        oh = jnp.einsum('bqk,bkd->bqd',
                        p.astype(MATMUL_DTYPE), vh.astype(MATMUL_DTYPE),
                        preferred_element_type=jnp.float32)

        wo_h = wo_ref[h * HEAD_DIM:(h + 1) * HEAD_DIM, :]  # static 8-row slice
        attn_proj = attn_proj + jnp.dot(
            oh.reshape(bt * s, HEAD_DIM).astype(MATMUL_DTYPE),
            wo_h.astype(MATMUL_DTYPE),
            preferred_element_type=jnp.float32)

    # ---- out-proj bias + residual 1 ----
    x1 = x + attn_proj + bo_ref[...]

    # ---- LayerNorm 2 ----
    xn2 = _layer_norm(x1, g2_ref[...], b2_ref[...])

    # ---- gated FFN: fused conv1|conv2 matmul, SiLU gate, conv3, residual ----
    h12 = jnp.dot(xn2.astype(MATMUL_DTYPE), w12_ref[...].astype(MATMUL_DTYPE),
                  preferred_element_type=jnp.float32) + b12_ref[...]
    h1 = h12[:, :D_FF]
    h2 = h12[:, D_FF:]
    g = (h1 * jax.nn.sigmoid(h1)) * h2                     # SiLU(conv1) * conv2
    y = jnp.dot(g.astype(MATMUL_DTYPE), w3_ref[...].astype(MATMUL_DTYPE),
                preferred_element_type=jnp.float32) + b3_ref[...]

    o_ref[...] = (x1 + y).reshape(bt, s, d).astype(o_ref.dtype)


# ------------------------------- wrapper ------------------------------------

def _pick_block_batch(B, S, target_rows=1024):
    """Largest divisor Bt of B with Bt*S <= ~target_rows; keep >=2 grid steps
    (v7x megacore) when that still leaves reasonably large tiles."""
    cap = max(1, target_rows // max(S, 1))
    bt = 1
    for cand in range(1, B + 1):
        if B % cand == 0 and cand <= cap:
            bt = cand
    if bt == B and B > 1:
        for cand in range(B // 2, 0, -1):
            if B % cand == 0 and cand * S >= 128:
                bt = cand
                break
    return bt


def full_attention_layer(x, params):
    """x: (B, S, D_MODEL) -> (out, None) matching the PyTorch (x, attn) return."""
    B, S, D = x.shape
    assert D == D_MODEL
    p = params

    # One-time weight fusion (outside the kernel, traced under jit, negligible).
    # SCALE folded into Q columns: (xn @ (Wq*SCALE) + bq*SCALE) == SCALE * q.
    wqkv = jnp.concatenate([p["wq"] * SCALE, p["wk"], p["wv"]], axis=1)   # (D, 3D)
    bqkv = jnp.concatenate([p["bq"] * SCALE, p["bk"], p["bv"]], axis=0)   # (3D,)
    w12 = jnp.concatenate([p["w1"], p["w2"]], axis=1)                     # (D, 2*D_FF)
    b12 = jnp.concatenate([p["b1"], p["b2"]], axis=0)                     # (2*D_FF,)

    row2d = lambda a: a.reshape(1, -1)
    weights = [row2d(p["ln1_g"]), row2d(p["ln1_b"]),
               wqkv, row2d(bqkv), p["wo"], row2d(p["bo"]),
               row2d(p["ln2_g"]), row2d(p["ln2_b"]),
               w12, row2d(b12), p["w3"], row2d(p["b3"])]

    Bt = _pick_block_batch(B, S)
    grid = (B // Bt,)

    x_spec = pl.BlockSpec((Bt, S, D), lambda b: (b, 0, 0))

    def resident(arr):                 # same block every grid step (stays in VMEM)
        return pl.BlockSpec(arr.shape, lambda b: (0,) * arr.ndim)

    out = pl.pallas_call(
        _gtb_kernel,
        grid=grid,
        out_shape=jax.ShapeDtypeStruct((B, S, D), x.dtype),
        in_specs=[x_spec] + [resident(w) for w in weights],
        out_specs=x_spec,
        compiler_params=pltpu.CompilerParams(
            dimension_semantics=("parallel",)),   # batch axis shardable on v7x megacore
    )(x, *weights)
    return out, None                              # attn weights are None in reference


# -------------------------------- params ------------------------------------

def init_params(key):
    ks = jax.random.split(key, 7)
    w = lambda k, shape: 0.02 * jax.random.normal(k, shape, jnp.float32)
    z = lambda n: jnp.zeros((n,), jnp.float32)
    return dict(
        # attention projections (AttentionLayer q/k/v/out)
        wq=w(ks[0], (D_MODEL, D_MODEL)), bq=z(D_MODEL),
        wk=w(ks[1], (D_MODEL, D_MODEL)), bk=z(D_MODEL),
        wv=w(ks[2], (D_MODEL, D_MODEL)), bv=z(D_MODEL),
        wo=w(ks[3], (D_MODEL, D_MODEL)), bo=z(D_MODEL),
        # layernorms
        ln1_g=jnp.ones((D_MODEL,), jnp.float32), ln1_b=z(D_MODEL),
        ln2_g=jnp.ones((D_MODEL,), jnp.float32), ln2_b=z(D_MODEL),
        # 1x1 convs of the gated FFN (conv1, conv2, conv3)
        w1=w(ks[4], (D_MODEL, D_FF)), b1=z(D_FF),
        w2=w(ks[5], (D_MODEL, D_FF)), b2=z(D_FF),
        w3=w(ks[6], (D_FF, D_MODEL)), b3=z(D_MODEL),
    )


if __name__ == "__main__":
    key = jax.random.PRNGKey(0)
    kx, kp = jax.random.split(key)

    B, S = 2, 8
    x = jax.random.normal(kx, (B, S, D_MODEL), jnp.float32)
    params = init_params(kp)

    out, attn = jax.jit(full_attention_layer)(x, params)
    out = jax.block_until_ready(out)
    assert out.shape == (B, S, D_MODEL), out.shape
    assert bool(jnp.all(jnp.isfinite(out)))
    assert attn is None
    print("KERNEL_OK")
</pallas_src>

<mosaic_0001>
module attributes {stable_mosaic.version = 11 : i64} {
  func.func @_gtb_kernel(%arg0: i32, %arg1: memref<2x8x32xf32, #tpu.memory_space<vmem>>, %arg2: memref<1x32xf32, #tpu.memory_space<vmem>>, %arg3: memref<1x32xf32, #tpu.memory_space<vmem>>, %arg4: memref<32x96xf32, #tpu.memory_space<vmem>>, %arg5: memref<1x96xf32, #tpu.memory_space<vmem>>, %arg6: memref<32x32xf32, #tpu.memory_space<vmem>>, %arg7: memref<1x32xf32, #tpu.memory_space<vmem>>, %arg8: memref<1x32xf32, #tpu.memory_space<vmem>>, %arg9: memref<1x32xf32, #tpu.memory_space<vmem>>, %arg10: memref<32x256xf32, #tpu.memory_space<vmem>>, %arg11: memref<1x256xf32, #tpu.memory_space<vmem>>, %arg12: memref<128x32xf32, #tpu.memory_space<vmem>>, %arg13: memref<1x32xf32, #tpu.memory_space<vmem>>, %arg14: memref<2x8x32xf32, #tpu.memory_space<vmem>>) attributes {dimension_semantics = [#tpu.dimension_semantics<parallel>], iteration_bounds = array<i64: 1>, scalar_prefetch = 0 : i64, scratch_operands = 0 : i64, tpu.core_type = #tpu.core_type<tc>, window_params = [{transform_indices = @transform_0, window_bounds = array<i64: 2, 8, 32>}, {pipeline_mode = #tpu.pipeline_mode<synchronous>, transform_indices = @transform_1, window_bounds = array<i64: 1, 32>}, {pipeline_mode = #tpu.pipeline_mode<synchronous>, transform_indices = @transform_2, window_bounds = array<i64: 1, 32>}, {pipeline_mode = #tpu.pipeline_mode<synchronous>, transform_indices = @transform_3, window_bounds = array<i64: 32, 96>}, {pipeline_mode = #tpu.pipeline_mode<synchronous>, transform_indices = @transform_4, window_bounds = array<i64: 1, 96>}, {pipeline_mode = #tpu.pipeline_mode<synchronous>, transform_indices = @transform_5, window_bounds = array<i64: 32, 32>}, {pipeline_mode = #tpu.pipeline_mode<synchronous>, transform_indices = @transform_6, window_bounds = array<i64: 1, 32>}, {pipeline_mode = #tpu.pipeline_mode<synchronous>, transform_indices = @transform_7, window_bounds = array<i64: 1, 32>}, {pipeline_mode = #tpu.pipeline_mode<synchronous>, transform_indices = @transform_8, window_bounds = array<i64: 1, 32>}, {pipeline_mode = #tpu.pipeline_mode<synchronous>, transform_indices = @transform_9, window_bounds = array<i64: 32, 256>}, {pipeline_mode = #tpu.pipeline_mode<synchronous>, transform_indices = @transform_10, window_bounds = array<i64: 1, 256>}, {pipeline_mode = #tpu.pipeline_mode<synchronous>, transform_indices = @transform_11, window_bounds = array<i64: 128, 32>}, {pipeline_mode = #tpu.pipeline_mode<synchronous>, transform_indices = @transform_12, window_bounds = array<i64: 1, 32>}, {transform_indices = @transform_13, window_bounds = array<i64: 2, 8, 32>}]} {
    %c0 = arith.constant 0 : index
    %c0_0 = arith.constant 0 : index
    %c0_1 = arith.constant 0 : index
    %0 = vector.load %arg1[%c0, %c0_0, %c0_1] : memref<2x8x32xf32, #tpu.memory_space<vmem>>, vector<2x8x32xf32>
    %1 = vector.shape_cast %0 : vector<2x8x32xf32> to vector<16x32xf32>
    %c0_2 = arith.constant 0 : index
    %c0_3 = arith.constant 0 : index
    %2 = vector.load %arg2[%c0_2, %c0_3] : memref<1x32xf32, #tpu.memory_space<vmem>>, vector<1x32xf32>
    %c0_4 = arith.constant 0 : index
    %c0_5 = arith.constant 0 : index
    %3 = vector.load %arg3[%c0_4, %c0_5] : memref<1x32xf32, #tpu.memory_space<vmem>>, vector<1x32xf32>
    %cst = arith.constant dense<0.000000e+00> : vector<16xf32>
    %4 = vector.multi_reduction <add>, %1, %cst [1] : vector<16x32xf32> to vector<16xf32>
    %5 = vector.shape_cast %4 : vector<16xf32> to vector<16x1xf32>
    %cst_6 = arith.constant 3.200000e+01 : f32
    %6 = vector.broadcast %cst_6 : f32 to vector<16x1xf32>
    %7 = arith.divf %5, %6 : vector<16x1xf32>
    %8 = vector.broadcast %7 : vector<16x1xf32> to vector<16x32xf32>
    %9 = arith.subf %1, %8 : vector<16x32xf32>
    %10 = arith.mulf %9, %9 : vector<16x32xf32>
    %cst_7 = arith.constant dense<0.000000e+00> : vector<16xf32>
    %11 = vector.multi_reduction <add>, %10, %cst_7 [1] : vector<16x32xf32> to vector<16xf32>
    %12 = vector.shape_cast %11 : vector<16xf32> to vector<16x1xf32>
    %cst_8 = arith.constant 3.200000e+01 : f32
    %13 = vector.broadcast %cst_8 : f32 to vector<16x1xf32>
    %14 = arith.divf %12, %13 : vector<16x1xf32>
    %15 = vector.broadcast %7 : vector<16x1xf32> to vector<16x32xf32>
    %16 = arith.subf %1, %15 : vector<16x32xf32>
    %cst_9 = arith.constant 9.99999974E-6 : f32
    %17 = vector.broadcast %cst_9 : f32 to vector<16x1xf32>
    %18 = arith.addf %14, %17 : vector<16x1xf32>
    %19 = math.rsqrt %18 : vector<16x1xf32>
    %20 = vector.broadcast %19 : vector<16x1xf32> to vector<16x32xf32>
    %21 = arith.mulf %16, %20 : vector<16x32xf32>
    %22 = vector.broadcast %2 : vector<1x32xf32> to vector<16x32xf32>
    %23 = arith.mulf %21, %22 : vector<16x32xf32>
    %24 = vector.broadcast %3 : vector<1x32xf32> to vector<16x32xf32>
    %25 = arith.addf %23, %24 : vector<16x32xf32>
    %c0_10 = arith.constant 0 : index
    %c0_11 = arith.constant 0 : index
    %26 = vector.load %arg4[%c0_10, %c0_11] : memref<32x96xf32, #tpu.memory_space<vmem>>, vector<32x96xf32>
    %cst_12 = arith.constant dense<0.000000e+00> : vector<16x96xf32>
    %27 = tpu.matmul %25, %26, %cst_12 {dimension_numbers = #tpu.dot_dimension_numbers<[1], [0], [0], [1], [0, 0, 1, 1], [], []>} : vector<16x32xf32>, vector<32x96xf32>, vector<16x96xf32> -> vector<16x96xf32>
    %c0_13 = arith.constant 0 : index
    %c0_14 = arith.constant 0 : index
    %28 = vector.load %arg5[%c0_13, %c0_14] : memref<1x96xf32, #tpu.memory_space<vmem>>, vector<1x96xf32>
    %29 = vector.broadcast %28 : vector<1x96xf32> to vector<16x96xf32>
    %30 = arith.addf %27, %29 : vector<16x96xf32>
    %31 = tpu.iota {dimensions = array<i32: 0>} : vector<8x8xi32>
    %32 = tpu.iota {dimensions = array<i32: 1>} : vector<8x8xi32>
    %33 = arith.cmpi sgt, %32, %31 : vector<8x8xi32>
    %cst_15 = arith.constant -1.000000e+30 : f32
    %cst_16 = arith.constant 0.000000e+00 : f32
    %34 = vector.broadcast %cst_15 : f32 to vector<8x8xf32>
    %35 = vector.broadcast %cst_16 : f32 to vector<8x8xf32>
    %36 = arith.select %33, %34, %35 : vector<8x8xi1>, vector<8x8xf32>
    %cst_17 = arith.constant 0.000000e+00 : f32
    %37 = vector.broadcast %cst_17 : f32 to vector<16x32xf32>
    %38 = vector.extract_strided_slice %30 {offsets = [0, 0], sizes = [16, 8], strides = [1, 1]} : vector<16x96xf32> to vector<16x8xf32>
    %39 = vector.shape_cast %38 : vector<16x8xf32> to vector<2x8x8xf32>
    %40 = vector.extract_strided_slice %30 {offsets = [0, 32], sizes = [16, 8], strides = [1, 1]} : vector<16x96xf32> to vector<16x8xf32>
    %41 = vector.shape_cast %40 : vector<16x8xf32> to vector<2x8x8xf32>
    %42 = vector.extract_strided_slice %30 {offsets = [0, 64], sizes = [16, 8], strides = [1, 1]} : vector<16x96xf32> to vector<16x8xf32>
    %43 = vector.shape_cast %42 : vector<16x8xf32> to vector<2x8x8xf32>
    "tpu.trace_start"() <{level = 10 : i32, message = "bqd,bkd->bqk"}> : () -> ()
    %cst_18 = arith.constant dense<0.000000e+00> : vector<2x8x8xf32>
    %44 = tpu.matmul %39, %41, %cst_18 {dimension_numbers = #tpu.dot_dimension_numbers<[2], [2], [1], [1], [0, 0, 0, 1, 1, 1], [0], [0]>} : vector<2x8x8xf32>, vector<2x8x8xf32>, vector<2x8x8xf32> -> vector<2x8x8xf32>
    "tpu.trace_stop"() : () -> ()
    %45 = vector.shape_cast %36 : vector<8x8xf32> to vector<1x8x8xf32>
    %46 = vector.broadcast %45 : vector<1x8x8xf32> to vector<2x8x8xf32>
    %47 = arith.addf %44, %46 : vector<2x8x8xf32>
    %cst_19 = arith.constant dense<0xFF800000> : vector<2x8xf32>
    %48 = vector.multi_reduction <maximumf>, %47, %cst_19 [2] : vector<2x8x8xf32> to vector<2x8xf32>
    %49 = vector.shape_cast %48 : vector<2x8xf32> to vector<2x8x1xf32>
    %50 = vector.broadcast %49 : vector<2x8x1xf32> to vector<2x8x8xf32>
    %51 = arith.subf %47, %50 : vector<2x8x8xf32>
    %52 = math.exp %51 : vector<2x8x8xf32>
    %cst_20 = arith.constant dense<0.000000e+00> : vector<2x8xf32>
    %53 = vector.multi_reduction <add>, %52, %cst_20 [2] : vector<2x8x8xf32> to vector<2x8xf32>
    %54 = vector.shape_cast %53 : vector<2x8xf32> to vector<2x8x1xf32>
    %55 = tpu.reciprocal %54 {approx = true} : vector<2x8x1xf32> -> vector<2x8x1xf32>
    %56 = vector.broadcast %55 : vector<2x8x1xf32> to vector<2x8x8xf32>
    %57 = arith.mulf %52, %56 : vector<2x8x8xf32>
    "tpu.trace_start"() <{level = 10 : i32, message = "bqk,bkd->bqd"}> : () -> ()
    %cst_21 = arith.constant dense<0.000000e+00> : vector<2x8x8xf32>
    %58 = tpu.matmul %57, %43, %cst_21 {dimension_numbers = #tpu.dot_dimension_numbers<[2], [1], [1], [2], [0, 0, 0, 1, 1, 2], [0], [0]>} : vector<2x8x8xf32>, vector<2x8x8xf32>, vector<2x8x8xf32> -> vector<2x8x8xf32>
    "tpu.trace_stop"() : () -> ()
    %c0_22 = arith.constant 0 : index
    %c0_23 = arith.constant 0 : index
    %59 = vector.load %arg6[%c0_22, %c0_23] : memref<32x32xf32, #tpu.memory_space<vmem>>, vector<8x32xf32>
    %60 = vector.shape_cast %58 : vector<2x8x8xf32> to vector<16x8xf32>
    %cst_24 = arith.constant dense<0.000000e+00> : vector<16x32xf32>
    %61 = tpu.matmul %60, %59, %cst_24 {dimension_numbers = #tpu.dot_dimension_numbers<[1], [0], [0], [1], [0, 0, 1, 1], [], []>} : vector<16x8xf32>, vector<8x32xf32>, vector<16x32xf32> -> vector<16x32xf32>
    %62 = arith.addf %37, %61 : vector<16x32xf32>
    %63 = vector.extract_strided_slice %30 {offsets = [0, 8], sizes = [16, 8], strides = [1, 1]} : vector<16x96xf32> to vector<16x8xf32>
    %64 = vector.shape_cast %63 : vector<16x8xf32> to vector<2x8x8xf32>
    %65 = vector.extract_strided_slice %30 {offsets = [0, 40], sizes = [16, 8], strides = [1, 1]} : vector<16x96xf32> to vector<16x8xf32>
    %66 = vector.shape_cast %65 : vector<16x8xf32> to vector<2x8x8xf32>
    %67 = vector.extract_strided_slice %30 {offsets = [0, 72], sizes = [16, 8], strides = [1, 1]} : vector<16x96xf32> to vector<16x8xf32>
    %68 = vector.shape_cast %67 : vector<16x8xf32> to vector<2x8x8xf32>
    "tpu.trace_start"() <{level = 10 : i32, message = "bqd,bkd->bqk"}> : () -> ()
    %cst_25 = arith.constant dense<0.000000e+00> : vector<2x8x8xf32>
    %69 = tpu.matmul %64, %66, %cst_25 {dimension_numbers = #tpu.dot_dimension_numbers<[2], [2], [1], [1], [0, 0, 0, 1, 1, 1], [0], [0]>} : vector<2x8x8xf32>, vector<2x8x8xf32>, vector<2x8x8xf32> -> vector<2x8x8xf32>
    "tpu.trace_stop"() : () -> ()
    %70 = vector.shape_cast %36 : vector<8x8xf32> to vector<1x8x8xf32>
    %71 = vector.broadcast %70 : vector<1x8x8xf32> to vector<2x8x8xf32>
    %72 = arith.addf %69, %71 : vector<2x8x8xf32>
    %cst_26 = arith.constant dense<0xFF800000> : vector<2x8xf32>
    %73 = vector.multi_reduction <maximumf>, %72, %cst_26 [2] : vector<2x8x8xf32> to vector<2x8xf32>
    %74 = vector.shape_cast %73 : vector<2x8xf32> to vector<2x8x1xf32>
    %75 = vector.broadcast %74 : vector<2x8x1xf32> to vector<2x8x8xf32>
    %76 = arith.subf %72, %75 : vector<2x8x8xf32>
    %77 = math.exp %76 : vector<2x8x8xf32>
    %cst_27 = arith.constant dense<0.000000e+00> : vector<2x8xf32>
    %78 = vector.multi_reduction <add>, %77, %cst_27 [2] : vector<2x8x8xf32> to vector<2x8xf32>
    %79 = vector.shape_cast %78 : vector<2x8xf32> to vector<2x8x1xf32>
    %80 = tpu.reciprocal %79 {approx = true} : vector<2x8x1xf32> -> vector<2x8x1xf32>
    %81 = vector.broadcast %80 : vector<2x8x1xf32> to vector<2x8x8xf32>
    %82 = arith.mulf %77, %81 : vector<2x8x8xf32>
    "tpu.trace_start"() <{level = 10 : i32, message = "bqk,bkd->bqd"}> : () -> ()
    %cst_28 = arith.constant dense<0.000000e+00> : vector<2x8x8xf32>
    %83 = tpu.matmul %82, %68, %cst_28 {dimension_numbers = #tpu.dot_dimension_numbers<[2], [1], [1], [2], [0, 0, 0, 1, 1, 2], [0], [0]>} : vector<2x8x8xf32>, vector<2x8x8xf32>, vector<2x8x8xf32> -> vector<2x8x8xf32>
    "tpu.trace_stop"() : () -> ()
    %c8 = arith.constant 8 : index
    %c0_29 = arith.constant 0 : index
    %84 = vector.load %arg6[%c8, %c0_29] : memref<32x32xf32, #tpu.memory_space<vmem>>, vector<8x32xf32>
    %85 = vector.shape_cast %83 : vector<2x8x8xf32> to vector<16x8xf32>
    %cst_30 = arith.constant dense<0.000000e+00> : vector<16x32xf32>
    %86 = tpu.matmul %85, %84, %cst_30 {dimension_numbers = #tpu.dot_dimension_numbers<[1], [0], [0], [1], [0, 0, 1, 1], [], []>} : vector<16x8xf32>, vector<8x32xf32>, vector<16x32xf32> -> vector<16x32xf32>
    %87 = arith.addf %62, %86 : vector<16x32xf32>
    %88 = vector.extract_strided_slice %30 {offsets = [0, 16], sizes = [16, 8], strides = [1, 1]} : vector<16x96xf32> to vector<16x8xf32>
    %89 = vector.shape_cast %88 : vector<16x8xf32> to vector<2x8x8xf32>
    %90 = vector.extract_strided_slice %30 {offsets = [0, 48], sizes = [16, 8], strides = [1, 1]} : vector<16x96xf32> to vector<16x8xf32>
    %91 = vector.shape_cast %90 : vector<16x8xf32> to vector<2x8x8xf32>
    %92 = vector.extract_strided_slice %30 {offsets = [0, 80], sizes = [16, 8], strides = [1, 1]} : vector<16x96xf32> to vector<16x8xf32>
    %93 = vector.shape_cast %92 : vector<16x8xf32> to vector<2x8x8xf32>
    "tpu.trace_start"() <{level = 10 : i32, message = "bqd,bkd->bqk"}> : () -> ()
    %cst_31 = arith.constant dense<0.000000e+00> : vector<2x8x8xf32>
    %94 = tpu.matmul %89, %91, %cst_31 {dimension_numbers = #tpu.dot_dimension_numbers<[2], [2], [1], [1], [0, 0, 0, 1, 1, 1], [0], [0]>} : vector<2x8x8xf32>, vector<2x8x8xf32>, vector<2x8x8xf32> -> vector<2x8x8xf32>
    "tpu.trace_stop"() : () -> ()
    %95 = vector.shape_cast %36 : vector<8x8xf32> to vector<1x8x8xf32>
    %96 = vector.broadcast %95 : vector<1x8x8xf32> to vector<2x8x8xf32>
    %97 = arith.addf %94, %96 : vector<2x8x8xf32>
    %cst_32 = arith.constant dense<0xFF800000> : vector<2x8xf32>
    %98 = vector.multi_reduction <maximumf>, %97, %cst_32 [2] : vector<2x8x8xf32> to vector<2x8xf32>
    %99 = vector.shape_cast %98 : vector<2x8xf32> to vector<2x8x1xf32>
    %100 = vector.broadcast %99 : vector<2x8x1xf32> to vector<2x8x8xf32>
    %101 = arith.subf %97, %100 : vector<2x8x8xf32>
    %102 = math.exp %101 : vector<2x8x8xf32>
    %cst_33 = arith.constant dense<0.000000e+00> : vector<2x8xf32>
    %103 = vector.multi_reduction <add>, %102, %cst_33 [2] : vector<2x8x8xf32> to vector<2x8xf32>
    %104 = vector.shape_cast %103 : vector<2x8xf32> to vector<2x8x1xf32>
    %105 = tpu.reciprocal %104 {approx = true} : vector<2x8x1xf32> -> vector<2x8x1xf32>
    %106 = vector.broadcast %105 : vector<2x8x1xf32> to vector<2x8x8xf32>
    %107 = arith.mulf %102, %106 : vector<2x8x8xf32>
    "tpu.trace_start"() <{level = 10 : i32, message = "bqk,bkd->bqd"}> : () -> ()
    %cst_34 = arith.constant dense<0.000000e+00> : vector<2x8x8xf32>
    %108 = tpu.matmul %107, %93, %cst_34 {dimension_numbers = #tpu.dot_dimension_numbers<[2], [1], [1], [2], [0, 0, 0, 1, 1, 2], [0], [0]>} : vector<2x8x8xf32>, vector<2x8x8xf32>, vector<2x8x8xf32> -> vector<2x8x8xf32>
    "tpu.trace_stop"() : () -> ()
    %c16 = arith.constant 16 : index
    %c0_35 = arith.constant 0 : index
    %109 = vector.load %arg6[%c16, %c0_35] : memref<32x32xf32, #tpu.memory_space<vmem>>, vector<8x32xf32>
    %110 = vector.shape_cast %108 : vector<2x8x8xf32> to vector<16x8xf32>
    %cst_36 = arith.constant dense<0.000000e+00> : vector<16x32xf32>
    %111 = tpu.matmul %110, %109, %cst_36 {dimension_numbers = #tpu.dot_dimension_numbers<[1], [0], [0], [1], [0, 0, 1, 1], [], []>} : vector<16x8xf32>, vector<8x32xf32>, vector<16x32xf32> -> vector<16x32xf32>
    %112 = arith.addf %87, %111 : vector<16x32xf32>
    %113 = vector.extract_strided_slice %30 {offsets = [0, 24], sizes = [16, 8], strides = [1, 1]} : vector<16x96xf32> to vector<16x8xf32>
    %114 = vector.shape_cast %113 : vector<16x8xf32> to vector<2x8x8xf32>
    %115 = vector.extract_strided_slice %30 {offsets = [0, 56], sizes = [16, 8], strides = [1, 1]} : vector<16x96xf32> to vector<16x8xf32>
    %116 = vector.shape_cast %115 : vector<16x8xf32> to vector<2x8x8xf32>
    %117 = vector.extract_strided_slice %30 {offsets = [0, 88], sizes = [16, 8], strides = [1, 1]} : vector<16x96xf32> to vector<16x8xf32>
    %118 = vector.shape_cast %117 : vector<16x8xf32> to vector<2x8x8xf32>
    "tpu.trace_start"() <{level = 10 : i32, message = "bqd,bkd->bqk"}> : () -> ()
    %cst_37 = arith.constant dense<0.000000e+00> : vector<2x8x8xf32>
    %119 = tpu.matmul %114, %116, %cst_37 {dimension_numbers = #tpu.dot_dimension_numbers<[2], [2], [1], [1], [0, 0, 0, 1, 1, 1], [0], [0]>} : vector<2x8x8xf32>, vector<2x8x8xf32>, vector<2x8x8xf32> -> vector<2x8x8xf32>
    "tpu.trace_stop"() : () -> ()
    %120 = vector.shape_cast %36 : vector<8x8xf32> to vector<1x8x8xf32>
    %121 = vector.broadcast %120 : vector<1x8x8xf32> to vector<2x8x8xf32>
    %122 = arith.addf %119, %121 : vector<2x8x8xf32>
    %cst_38 = arith.constant dense<0xFF800000> : vector<2x8xf32>
    %123 = vector.multi_reduction <maximumf>, %122, %cst_38 [2] : vector<2x8x8xf32> to vector<2x8xf32>
    %124 = vector.shape_cast %123 : vector<2x8xf32> to vector<2x8x1xf32>
    %125 = vector.broadcast %124 : vector<2x8x1xf32> to vector<2x8x8xf32>
    %126 = arith.subf %122, %125 : vector<2x8x8xf32>
    %127 = math.exp %126 : vector<2x8x8xf32>
    %cst_39 = arith.constant dense<0.000000e+00> : vector<2x8xf32>
    %128 = vector.multi_reduction <add>, %127, %cst_39 [2] : vector<2x8x8xf32> to vector<2x8xf32>
    %129 = vector.shape_cast %128 : vector<2x8xf32> to vector<2x8x1xf32>
    %130 = tpu.reciprocal %129 {approx = true} : vector<2x8x1xf32> -> vector<2x8x1xf32>
    %131 = vector.broadcast %130 : vector<2x8x1xf32> to vector<2x8x8xf32>
    %132 = arith.mulf %127, %131 : vector<2x8x8xf32>
    "tpu.trace_start"() <{level = 10 : i32, message = "bqk,bkd->bqd"}> : () -> ()
    %cst_40 = arith.constant dense<0.000000e+00> : vector<2x8x8xf32>
    %133 = tpu.matmul %132, %118, %cst_40 {dimension_numbers = #tpu.dot_dimension_numbers<[2], [1], [1], [2], [0, 0, 0, 1, 1, 2], [0], [0]>} : vector<2x8x8xf32>, vector<2x8x8xf32>, vector<2x8x8xf32> -> vector<2x8x8xf32>
    "tpu.trace_stop"() : () -> ()
    %c24 = arith.constant 24 : index
    %c0_41 = arith.constant 0 : index
    %134 = vector.load %arg6[%c24, %c0_41] : memref<32x32xf32, #tpu.memory_space<vmem>>, vector<8x32xf32>
    %135 = vector.shape_cast %133 : vector<2x8x8xf32> to vector<16x8xf32>
    %cst_42 = arith.constant dense<0.000000e+00> : vector<16x32xf32>
    %136 = tpu.matmul %135, %134, %cst_42 {dimension_numbers = #tpu.dot_dimension_numbers<[1], [0], [0], [1], [0, 0, 1, 1], [], []>} : vector<16x8xf32>, vector<8x32xf32>, vector<16x32xf32> -> vector<16x32xf32>
    %137 = arith.addf %112, %136 : vector<16x32xf32>
    %138 = arith.addf %1, %137 : vector<16x32xf32>
    %c0_43 = arith.constant 0 : index
    %c0_44 = arith.constant 0 : index
    %139 = vector.load %arg7[%c0_43, %c0_44] : memref<1x32xf32, #tpu.memory_space<vmem>>, vector<1x32xf32>
    %140 = vector.broadcast %139 : vector<1x32xf32> to vector<16x32xf32>
    %141 = arith.addf %138, %140 : vector<16x32xf32>
    %c0_45 = arith.constant 0 : index
    %c0_46 = arith.constant 0 : index
    %142 = vector.load %arg8[%c0_45, %c0_46] : memref<1x32xf32, #tpu.memory_space<vmem>>, vector<1x32xf32>
    %c0_47 = arith.constant 0 : index
    %c0_48 = arith.constant 0 : index
    %143 = vector.load %arg9[%c0_47, %c0_48] : memref<1x32xf32, #tpu.memory_space<vmem>>, vector<1x32xf32>
    %cst_49 = arith.constant dense<0.000000e+00> : vector<16xf32>
    %144 = vector.multi_reduction <add>, %141, %cst_49 [1] : vector<16x32xf32> to vector<16xf32>
    %145 = vector.shape_cast %144 : vector<16xf32> to vector<16x1xf32>
    %cst_50 = arith.constant 3.200000e+01 : f32
    %146 = vector.broadcast %cst_50 : f32 to vector<16x1xf32>
    %147 = arith.divf %145, %146 : vector<16x1xf32>
    %148 = vector.broadcast %147 : vector<16x1xf32> to vector<16x32xf32>
    %149 = arith.subf %141, %148 : vector<16x32xf32>
    %150 = arith.mulf %149, %149 : vector<16x32xf32>
    %cst_51 = arith.constant dense<0.000000e+00> : vector<16xf32>
    %151 = vector.multi_reduction <add>, %150, %cst_51 [1] : vector<16x32xf32> to vector<16xf32>
    %152 = vector.shape_cast %151 : vector<16xf32> to vector<16x1xf32>
    %cst_52 = arith.constant 3.200000e+01 : f32
    %153 = vector.broadcast %cst_52 : f32 to vector<16x1xf32>
    %154 = arith.divf %152, %153 : vector<16x1xf32>
    %155 = vector.broadcast %147 : vector<16x1xf32> to vector<16x32xf32>
    %156 = arith.subf %141, %155 : vector<16x32xf32>
    %cst_53 = arith.constant 9.99999974E-6 : f32
    %157 = vector.broadcast %cst_53 : f32 to vector<16x1xf32>
    %158 = arith.addf %154, %157 : vector<16x1xf32>
    %159 = math.rsqrt %158 : vector<16x1xf32>
    %160 = vector.broadcast %159 : vector<16x1xf32> to vector<16x32xf32>
    %161 = arith.mulf %156, %160 : vector<16x32xf32>
    %162 = vector.broadcast %142 : vector<1x32xf32> to vector<16x32xf32>
    %163 = arith.mulf %161, %162 : vector<16x32xf32>
    %164 = vector.broadcast %143 : vector<1x32xf32> to vector<16x32xf32>
    %165 = arith.addf %163, %164 : vector<16x32xf32>
    %c0_54 = arith.constant 0 : index
    %c0_55 = arith.constant 0 : index
    %166 = vector.load %arg10[%c0_54, %c0_55] : memref<32x256xf32, #tpu.memory_space<vmem>>, vector<32x256xf32>
    %cst_56 = arith.constant dense<0.000000e+00> : vector<16x256xf32>
    %167 = tpu.matmul %165, %166, %cst_56 {dimension_numbers = #tpu.dot_dimension_numbers<[1], [0], [0], [1], [0, 0, 1, 1], [], []>} : vector<16x32xf32>, vector<32x256xf32>, vector<16x256xf32> -> vector<16x256xf32>
    %c0_57 = arith.constant 0 : index
    %c0_58 = arith.constant 0 : index
    %168 = vector.load %arg11[%c0_57, %c0_58] : memref<1x256xf32, #tpu.memory_space<vmem>>, vector<1x256xf32>
    %169 = vector.broadcast %168 : vector<1x256xf32> to vector<16x256xf32>
    %170 = arith.addf %167, %169 : vector<16x256xf32>
    %171 = vector.extract_strided_slice %170 {offsets = [0, 0], sizes = [16, 128], strides = [1, 1]} : vector<16x256xf32> to vector<16x128xf32>
    %172 = vector.extract_strided_slice %170 {offsets = [0, 128], sizes = [16, 128], strides = [1, 1]} : vector<16x256xf32> to vector<16x128xf32>
    %173 = arith.negf %171 : vector<16x128xf32>
    %174 = math.exp %173 : vector<16x128xf32>
    %cst_59 = arith.constant 1.000000e+00 : f32
    %175 = vector.broadcast %cst_59 : f32 to vector<16x128xf32>
    %176 = arith.addf %175, %174 : vector<16x128xf32>
    %177 = arith.divf %175, %176 : vector<16x128xf32>
    %178 = arith.mulf %171, %177 : vector<16x128xf32>
    %179 = arith.mulf %178, %172 : vector<16x128xf32>
    %c0_60 = arith.constant 0 : index
    %c0_61 = arith.constant 0 : index
    %180 = vector.load %arg12[%c0_60, %c0_61] : memref<128x32xf32, #tpu.memory_space<vmem>>, vector<128x32xf32>
    %cst_62 = arith.constant dense<0.000000e+00> : vector<16x32xf32>
    %181 = tpu.matmul %179, %180, %cst_62 {dimension_numbers = #tpu.dot_dimension_numbers<[1], [0], [0], [1], [0, 0, 1, 1], [], []>} : vector<16x128xf32>, vector<128x32xf32>, vector<16x32xf32> -> vector<16x32xf32>
    %c0_63 = arith.constant 0 : index
    %c0_64 = arith.constant 0 : index
    %182 = vector.load %arg13[%c0_63, %c0_64] : memref<1x32xf32, #tpu.memory_space<vmem>>, vector<1x32xf32>
    %183 = vector.broadcast %182 : vector<1x32xf32> to vector<16x32xf32>
    %184 = arith.addf %181, %183 : vector<16x32xf32>
    %185 = arith.addf %141, %184 : vector<16x32xf32>
    %186 = vector.shape_cast %185 : vector<16x32xf32> to vector<2x8x32xf32>
    %c0_65 = arith.constant 0 : index
    %c0_66 = arith.constant 0 : index
    %c0_67 = arith.constant 0 : index
    %187 = vector.load %arg14[%c0_65, %c0_66, %c0_67] : memref<2x8x32xf32, #tpu.memory_space<vmem>>, vector<2x8x32xf32>
    tpu.vector_store %arg14[%c0_65, %c0_66, %c0_67], %186 {strides = array<i32>} : memref<2x8x32xf32, #tpu.memory_space<vmem>>, vector<2x8x32xf32>,
    return
  }
  func.func @transform_0(%arg0: i32) -> (i32, i32, i32) {
    %c0_i32 = arith.constant 0 : i32
    %c0_i32_0 = arith.constant 0 : i32
    %c0_i32_1 = arith.constant 0 : i32
    return %arg0, %c0_i32, %c0_i32_0 : i32, i32, i32
  }
  func.func @transform_1(%arg0: i32) -> (i32, i32) {
    %c0_i32 = arith.constant 0 : i32
    %c0_i32_0 = arith.constant 0 : i32
    %c0_i32_1 = arith.constant 0 : i32
    return %c0_i32, %c0_i32_0 : i32, i32
  }
  func.func @transform_2(%arg0: i32) -> (i32, i32) {
    %c0_i32 = arith.constant 0 : i32
    %c0_i32_0 = arith.constant 0 : i32
    %c0_i32_1 = arith.constant 0 : i32
    return %c0_i32, %c0_i32_0 : i32, i32
  }
  func.func @transform_3(%arg0: i32) -> (i32, i32) {
    %c0_i32 = arith.constant 0 : i32
    %c0_i32_0 = arith.constant 0 : i32
    %c0_i32_1 = arith.constant 0 : i32
    return %c0_i32, %c0_i32_0 : i32, i32
  }
  func.func @transform_4(%arg0: i32) -> (i32, i32) {
    %c0_i32 = arith.constant 0 : i32
    %c0_i32_0 = arith.constant 0 : i32
    %c0_i32_1 = arith.constant 0 : i32
    return %c0_i32, %c0_i32_0 : i32, i32
  }
  func.func @transform_5(%arg0: i32) -> (i32, i32) {
    %c0_i32 = arith.constant 0 : i32
    %c0_i32_0 = arith.constant 0 : i32
    %c0_i32_1 = arith.constant 0 : i32
    return %c0_i32, %c0_i32_0 : i32, i32
  }
  func.func @transform_6(%arg0: i32) -> (i32, i32) {
    %c0_i32 = arith.constant 0 : i32
    %c0_i32_0 = arith.constant 0 : i32
    %c0_i32_1 = arith.constant 0 : i32
    return %c0_i32, %c0_i32_0 : i32, i32
  }
  func.func @transform_7(%arg0: i32) -> (i32, i32) {
    %c0_i32 = arith.constant 0 : i32
    %c0_i32_0 = arith.constant 0 : i32
    %c0_i32_1 = arith.constant 0 : i32
    return %c0_i32, %c0_i32_0 : i32, i32
  }
  func.func @transform_8(%arg0: i32) -> (i32, i32) {
    %c0_i32 = arith.constant 0 : i32
    %c0_i32_0 = arith.constant 0 : i32
    %c0_i32_1 = arith.constant 0 : i32
    return %c0_i32, %c0_i32_0 : i32, i32
  }
  func.func @transform_9(%arg0: i32) -> (i32, i32) {
    %c0_i32 = arith.constant 0 : i32
    %c0_i32_0 = arith.constant 0 : i32
    %c0_i32_1 = arith.constant 0 : i32
    return %c0_i32, %c0_i32_0 : i32, i32
  }
  func.func @transform_10(%arg0: i32) -> (i32, i32) {
    %c0_i32 = arith.constant 0 : i32
    %c0_i32_0 = arith.constant 0 : i32
    %c0_i32_1 = arith.constant 0 : i32
    return %c0_i32, %c0_i32_0 : i32, i32
  }
  func.func @transform_11(%arg0: i32) -> (i32, i32) {
    %c0_i32 = arith.constant 0 : i32
    %c0_i32_0 = arith.constant 0 : i32
    %c0_i32_1 = arith.constant 0 : i32
    return %c0_i32, %c0_i32_0 : i32, i32
  }
  func.func @transform_12(%arg0: i32) -> (i32, i32) {
    %c0_i32 = arith.constant 0 : i32
    %c0_i32_0 = arith.constant 0 : i32
    %c0_i32_1 = arith.constant 0 : i32
    return %c0_i32, %c0_i32_0 : i32, i32
  }
  func.func @transform_13(%arg0: i32) -> (i32, i32, i32) {
    %c0_i32 = arith.constant 0 : i32
    %c0_i32_0 = arith.constant 0 : i32
    %c0_i32_1 = arith.constant 0 : i32
    return %arg0, %c0_i32, %c0_i32_0 : i32, i32, i32
  }
}

</mosaic_0001>

<llo_original>
// kernel: full_attention_layer.1
$region0: #{full_attention_layer.1}
  #allocation0 [shape = 'u32[]', space=smem, size = 0x4, offset = 0x4, fixed_abs, tag = 'smem constant byte address 0x4 - core index']
  #allocation1 [shape = 'u32[72,128]{1,0:T(1,128)}', space=vmem, size = 0x9000, scoped, tag = 'internal scratch']
  %s0 = inlined_call_operand.vmem [shape: f32[2,8,32], index: 0, kind: input, shape index: {}]
  %s1 = inlined_call_operand.vmem [shape: f32[1,32], index: 1, kind: input, shape index: {}]
  %s2 = inlined_call_operand.vmem [shape: f32[1,32], index: 2, kind: input, shape index: {}]
  %s3 = inlined_call_operand.vmem [shape: f32[32,96], index: 3, kind: input, shape index: {}]
  %s4 = inlined_call_operand.vmem [shape: f32[1,96], index: 4, kind: input, shape index: {}]
  %s5 = inlined_call_operand.vmem [shape: f32[32,32], index: 5, kind: input, shape index: {}]
  %s6 = inlined_call_operand.vmem [shape: f32[1,32], index: 6, kind: input, shape index: {}]
  %s7 = inlined_call_operand.vmem [shape: f32[1,32], index: 7, kind: input, shape index: {}]
  %s8 = inlined_call_operand.vmem [shape: f32[1,32], index: 8, kind: input, shape index: {}]
  %s9 = inlined_call_operand.vmem [shape: f32[32,256], index: 9, kind: input, shape index: {}]
  %s10 = inlined_call_operand.vmem [shape: f32[1,256], index: 10, kind: input, shape index: {}]
  %s11 = inlined_call_operand.vmem [shape: f32[128,32], index: 11, kind: input, shape index: {}]
  %s12 = inlined_call_operand.vmem [shape: f32[1,32], index: 12, kind: input, shape index: {}]
  %s13 = inlined_call_operand.hbm [shape: f32[2,8,32], index: 13, kind: output, shape index: {}]
  %s14 = sld [smem:[#allocation0]]
  $region62: #{full_attention_layer.1} parent=0
    _
  %s16 = ssub.s32 1, %s14
  %s17 = scalar_select 0, %s16, %s14
  $region1: #{full_attention_layer.1} parent=0
    #allocation2 [shape = 'u8[8192]{0}', space=vmem, size = 0x2000, scoped, tag = 'output window, operand 0, single buffered']
    #allocation3 [shape = 's32[1]{0}', space=sflag, size = 0x4, scoped, tag = 'scoped memory for full_attention_layer.1']
    %18 = vsyncpa [#allocation3], 0
    // Predicated region
    $region2: #{full_attention_layer.1} parent=1 // pred_check
      _
    $region3: #{full_attention_layer.1} parent=1 // pred_check_branch
      %20 = sbr.rel (0) target = $region5
    $region4: #{full_attention_layer.1} parent=1 // pred_region
      _
    $region5: #{full_attention_layer.1} parent=1 // pred_fallthru
      _
    // Predicated region
    $region6: #{full_attention_layer.1} parent=1 // pred_check
      _
    $region7: #{full_attention_layer.1} parent=1 // pred_check_branch
      %22 = sbr.rel (0) target = $region9
    $region8: #{full_attention_layer.1} parent=1 // pred_region
      _
    $region9: #{full_attention_layer.1} parent=1 // pred_fallthru
      _
    // Predicated region
    $region10: #{full_attention_layer.1} parent=1 // pred_check
      _
    $region11: #{full_attention_layer.1} parent=1 // pred_check_branch
      %24 = sbr.rel (0) target = $region13
    $region12: #{full_attention_layer.1} parent=1 // pred_region
      _
    $region13: #{full_attention_layer.1} parent=1 // pred_fallthru
      _
    // Predicated region
    $region14: #{full_attention_layer.1} parent=1 // pred_check
      _
    $region15: #{full_attention_layer.1} parent=1 // pred_check_branch
      %26 = sbr.rel (0) target = $region17
    $region16: #{full_attention_layer.1} parent=1 // pred_region
      _
    $region17: #{full_attention_layer.1} parent=1 // pred_fallthru
      _
    // Predicated region
    $region18: #{full_attention_layer.1} parent=1 // pred_check
      _
    $region19: #{full_attention_layer.1} parent=1 // pred_check_branch
      %28 = sbr.rel (0) target = $region21
    $region20: #{full_attention_layer.1} parent=1 // pred_region
      _
    $region21: #{full_attention_layer.1} parent=1 // pred_fallthru
      _
    // Predicated region
    $region22: #{full_attention_layer.1} parent=1 // pred_check
      _
    $region23: #{full_attention_layer.1} parent=1 // pred_check_branch
      %30 = sbr.rel (0) target = $region25
    $region24: #{full_attention_layer.1} parent=1 // pred_region
      _
    $region25: #{full_attention_layer.1} parent=1 // pred_fallthru
      _
    // Predicated region
    $region26: #{full_attention_layer.1} parent=1 // pred_check
      _
    $region27: #{full_attention_layer.1} parent=1 // pred_check_branch
      %32 = sbr.rel (0) target = $region29
    $region28: #{full_attention_layer.1} parent=1 // pred_region
      _
    $region29: #{full_attention_layer.1} parent=1 // pred_fallthru
      _
    // Predicated region
    $region30: #{full_attention_layer.1} parent=1 // pred_check
      _
    $region31: #{full_attention_layer.1} parent=1 // pred_check_branch
      %34 = sbr.rel (0) target = $region33
    $region32: #{full_attention_layer.1} parent=1 // pred_region
      _
    $region33: #{full_attention_layer.1} parent=1 // pred_fallthru
      _
    // Predicated region
    $region34: #{full_attention_layer.1} parent=1 // pred_check
      _
    $region35: #{full_attention_layer.1} parent=1 // pred_check_branch
      %36 = sbr.rel (0) target = $region37
    $region36: #{full_attention_layer.1} parent=1 // pred_region
      _
    $region37: #{full_attention_layer.1} parent=1 // pred_fallthru
      _
    // Predicated region
    $region38: #{full_attention_layer.1} parent=1 // pred_check
      _
    $region39: #{full_attention_layer.1} parent=1 // pred_check_branch
      %38 = sbr.rel (0) target = $region41
    $region40: #{full_attention_layer.1} parent=1 // pred_region
      _
    $region41: #{full_attention_layer.1} parent=1 // pred_fallthru
      _
    // Predicated region
    $region42: #{full_attention_layer.1} parent=1 // pred_check
      _
    $region43: #{full_attention_layer.1} parent=1 // pred_check_branch
      %40 = sbr.rel (0) target = $region45
    $region44: #{full_attention_layer.1} parent=1 // pred_region
      _
    $region45: #{full_attention_layer.1} parent=1 // pred_fallthru
      _
    // Predicated region
    $region46: #{full_attention_layer.1} parent=1 // pred_check
      _
    $region47: #{full_attention_layer.1} parent=1 // pred_check_branch
      %42 = sbr.rel (0) target = $region49
    $region48: #{full_attention_layer.1} parent=1 // pred_region
      _
    $region49: #{full_attention_layer.1} parent=1 // pred_fallthru
      _
    // Predicated region
    $region50: #{full_attention_layer.1} parent=1 // pred_check
      _
    $region51: #{full_attention_layer.1} parent=1 // pred_check_branch
      %44 = sbr.rel (0) target = $region53
    $region52: #{full_attention_layer.1} parent=1 // pred_region
      _
    $region53: #{full_attention_layer.1} parent=1 // pred_fallthru
      _
    %v45 = vld [vmem:[%s0] sm:$0xff]
    %v46 = vld [vmem:[%s0 + $0x8] sm:$0xff]
    %v47 = vld [vmem:[%s1] sm:$0x1]
    %v48 = vld [vmem:[%s2] sm:$0x1]
    %vm49 = vcmask 261120
    %v50 = vsel %vm49, %v45, 0.0
    %51 = vadd.xlane.f32.xlu0 %v50
    %v52 = vpop.xlane.xlu0 %51
    %v53 = vsel %vm49, %v46, 0.0
    %54 = vadd.xlane.f32.xlu0 %v53
    %v55 = vpop.xlane.xlu0 %54
    %v56 = vrcp.pop 32.0
    %v57 = vmul.f32 32.0, %v56
    %v58 = vsub.f32 1.0, %v57
    %v59 = vmul.f32 %v56, %v58
    %v60 = vadd.f32 %v56, %v59
    %vm61 = vweird.f32 %v56
    %v62 = vsel %vm61, %v56, %v60
    %v63 = vmul.f32 %v52, %v62
    %v64 = vmul.f32 %v55, %v62
    %v65 = vsub.f32 %v45, %v63
    %v66 = vsub.f32 %v46, %v64
    %v67 = vmul.f32 %v65, %v65
    %v68 = vmul.f32 %v66, %v66
    %v69 = vsel %vm49, %v67, 0.0
    %70 = vadd.xlane.f32.xlu0 %v69
    %v71 = vpop.xlane.xlu0 %70
    %v72 = vsel %vm49, %v68, 0.0
    %73 = vadd.xlane.f32.xlu0 %v72
    %v74 = vpop.xlane.xlu0 %73
    %v75 = vmul.f32 %v71, %v62
    %v76 = vmul.f32 %v74, %v62
    %v77 = vadd.f32 %v75, 1e-05
    %v78 = vadd.f32 %v76, 1e-05
    %v79 = vrsqrt.pop %v77
    %v80 = vmul.f32 %v79, %v77
    %v81 = vmul.f32 %v80, %v79
    %v82 = vmul.f32 0.5, %v81
    %v83 = vsub.f32 1.5, %v82
    %v84 = vmul.f32 %v79, %v83
    %vm85 = vweird.f32 %v77
    %vm86 = vweird.f32 %v79
    %vm87 = vmor %vm85, %vm86
    %v88 = vsel %vm87, %v79, %v84
    %v89 = vrsqrt.pop %v78
    %v90 = vmul.f32 %v89, %v78
    %v91 = vmul.f32 %v90, %v89
    %v92 = vmul.f32 0.5, %v91
    %v93 = vsub.f32 1.5, %v92
    %v94 = vmul.f32 %v89, %v93
    %vm95 = vweird.f32 %v78
    %vm96 = vweird.f32 %v89
    %vm97 = vmor %vm95, %vm96
    %v98 = vsel %vm97, %v89, %v94
    %v99 = vmul.f32 %v65, %v88
    %v100 = vmul.f32 %v66, %v98
    %v102 = vperm.slane %v47, 0
    %v104 = vmul.f32 %v99, %v102
    %v105 = vmul.f32 %v100, %v102
    %v107 = vperm.slane %v48, 0
    %v109 = vadd.f32 %v104, %v107
    %v110 = vadd.f32 %v105, %v107
    %v111 = vld [vmem:[%s3] sm:$0xff]
    %v112 = vld [vmem:[%s3 + $0x8] sm:$0xff]
    %v113 = vld [vmem:[%s3 + $0x10] sm:$0xff]
    %v114 = vld [vmem:[%s3 + $0x18] sm:$0xff]
    %v115 = vld [vmem:[%s4] sm:$0x1]
    %v117 = vperm.slane %v115, 0
    %v120 = vsel %vm49, %v109, 0
    %v123 = vsel %vm49, %v110, 0
    %125 = vmatpush.msra.mxu0 0.0
    %126 = vmatpush.msra.mxu0 0.0
    %127 = vmatpush.msra.mxu0 0.0
    %128 = vmatpush.msra.mxu0 0.0
    %129 = vmatpush.msra.mxu0 0.0
    %130 = vmatpush.msra.mxu0 0.0
    %131 = vmatpush.msra.mxu0 0.0
    %132 = vmatpush.msra.mxu0 0.0
    %133 = vmatpush.msra.mxu0 0.0
    %134 = vmatpush.msra.mxu0 0.0
    %135 = vmatpush.msra.mxu0 0.0
    %136 = vmatpush.msra.mxu0 0.0
    %137 = vmatpush.msra.mxu0 %v114
    %138 = vmatpush.msra.mxu0 %v113
    %139 = vmatpush.msra.mxu0 %v112
    %140 = vmatpush.msra.mxu0 %v111
    %141 = vmatmul.f32.gmra.mxu0 %v120
    %v142 = vpop.f32.mrf.mxu0
    %v143 = vadd.f32 %v117, %v142
    %144 = vmatmul.f32.gmra.mxu0 %v123
    %v145 = vpop.f32.mrf.mxu0
    %v146 = vadd.f32 %v117, %v145
    %147 = vdwg.mxu0
    %v148 = vlaneseq
    %v149 = vshrl.u32 %v148, 7
    %v150 = vlaneseq
    %v151 = vand.u32 %v150, 127
    %vm152 = vcmp.gt.s32.totalorder %v151, %v149
    %v153 = vsel %vm152, -1e+30, 0.0
    %155 = vrot.lane.b32.xlu0 %v143, 96
    %v156 = vpop.permute.xlu0 %155
    %vm157 = vcmask 64512
    %v158 = vsel %vm157, %v143, 0
    %v160 = vsel %vm157, %v156, 0
    %162 = vmatpush.xpose.msra.mxu0 0.0
    %163 = vmatpush.xpose.msra.mxu0 0.0
    %164 = vmatpush.xpose.msra.mxu0 0.0
    %165 = vmatpush.xpose.msra.mxu0 0.0
    %166 = vmatpush.xpose.msra.mxu0 0.0
    %167 = vmatpush.xpose.msra.mxu0 0.0
    %168 = vmatpush.xpose.msra.mxu0 0.0
    %169 = vmatpush.xpose.msra.mxu0 0.0
    %170 = vmatpush.xpose.msra.mxu0 0.0
    %171 = vmatpush.xpose.msra.mxu0 0.0
    %172 = vmatpush.xpose.msra.mxu0 0.0
    %173 = vmatpush.xpose.msra.mxu0 0.0
    %174 = vmatpush.xpose.msra.mxu0 0.0
    %175 = vmatpush.xpose.msra.mxu0 0.0
    %176 = vmatpush.xpose.msra.mxu0 0.0
    %177 = vmatpush.xpose.msra.mxu0 %v160
    %178 = vmatmul.f32.gmra.mxu0 %v158
    %v179 = vpop.f32.mrf.mxu0
    %v180 = vadd.f32 %v153, %v179
    %181 = vdwg.mxu0
    %183 = vrot.lane.b32.xlu0 %v146, 96
    %v184 = vpop.permute.xlu0 %183
    %v185 = vsel %vm157, %v146, 0
    %v187 = vsel %vm157, %v184, 0
    %189 = vmatpush.xpose.msra.mxu0 0.0
    %190 = vmatpush.xpose.msra.mxu0 0.0
    %191 = vmatpush.xpose.msra.mxu0 0.0
    %192 = vmatpush.xpose.msra.mxu0 0.0
    %193 = vmatpush.xpose.msra.mxu0 0.0
    %194 = vmatpush.xpose.msra.mxu0 0.0
    %195 = vmatpush.xpose.msra.mxu0 0.0
    %196 = vmatpush.xpose.msra.mxu0 0.0
    %197 = vmatpush.xpose.msra.mxu0 0.0
    %198 = vmatpush.xpose.msra.mxu0 0.0
    %199 = vmatpush.xpose.msra.mxu0 0.0
    %200 = vmatpush.xpose.msra.mxu0 0.0
    %201 = vmatpush.xpose.msra.mxu0 0.0
    %202 = vmatpush.xpose.msra.mxu0 0.0
    %203 = vmatpush.xpose.msra.mxu0 0.0
    %204 = vmatpush.xpose.msra.mxu0 %v187
    %205 = vmatmul.f32.gmra.mxu0 %v185
    %v206 = vpop.f32.mrf.mxu0
    %v207 = vadd.f32 %v153, %v206
    %208 = vdwg.mxu0
    %v209 = vsel %vm157, %v180, -inf
    %210 = vmax.xlane.f32.xlu0 %v209
    %v211 = vpop.xlane.xlu0 %210
    %v212 = vsel %vm157, %v207, -inf
    %213 = vmax.xlane.f32.xlu0 %v212
    %v214 = vpop.xlane.xlu0 %213
    %v215 = vsub.f32 %v180, %v211
    %v216 = vsub.f32 %v207, %v214
    %v217 = vmul.f32 %v215, 1.442695
    %v218 = vpow.pop %v217
    %v219 = vmul.f32 %v216, 1.442695
    %v220 = vpow.pop %v219
    %v221 = vsel %vm157, %v218, 0.0
    %222 = vadd.xlane.f32.xlu0 %v221
    %v223 = vpop.xlane.xlu0 %222
    %v224 = vsel %vm157, %v220, 0.0
    %225 = vadd.xlane.f32.xlu0 %v224
    %v226 = vpop.xlane.xlu0 %225
    %v227 = vrcp.pop %v223
    %v228 = vrcp.pop %v226
    %v229 = vmul.f32 %v218, %v227
    %v230 = vmul.f32 %v220, %v228
    %231 = vrot.lane.b32.xlu0 %v143, 64
    %v232 = vpop.permute.xlu0 %231
    %v235 = vsel %vm157, %v229, 0
    %237 = vmatpush.msra.mxu0 0.0
    %238 = vmatpush.msra.mxu0 0.0
    %239 = vmatpush.msra.mxu0 0.0
    %240 = vmatpush.msra.mxu0 0.0
    %241 = vmatpush.msra.mxu0 0.0
    %242 = vmatpush.msra.mxu0 0.0
    %243 = vmatpush.msra.mxu0 0.0
    %244 = vmatpush.msra.mxu0 0.0
    %245 = vmatpush.msra.mxu0 0.0
    %246 = vmatpush.msra.mxu0 0.0
    %247 = vmatpush.msra.mxu0 0.0
    %248 = vmatpush.msra.mxu0 0.0
    %249 = vmatpush.msra.mxu0 0.0
    %250 = vmatpush.msra.mxu0 0.0
    %251 = vmatpush.msra.mxu0 0.0
    %252 = vmatpush.msra.mxu0 %v232
    %253 = vmatmul.f32.gmra.mxu0 %v235
    %v254 = vpop.f32.mrf.mxu0
    %v255 = vadd.f32 0.0, %v254
    %256 = vdwg.mxu0
    %257 = vrot.lane.b32.xlu0 %v146, 64
    %v258 = vpop.permute.xlu0 %257
    %v261 = vsel %vm157, %v230, 0
    %263 = vmatpush.msra.mxu0 0.0
    %264 = vmatpush.msra.mxu0 0.0
    %265 = vmatpush.msra.mxu0 0.0
    %266 = vmatpush.msra.mxu0 0.0
    %267 = vmatpush.msra.mxu0 0.0
    %268 = vmatpush.msra.mxu0 0.0
    %269 = vmatpush.msra.mxu0 0.0
    %270 = vmatpush.msra.mxu0 0.0
    %271 = vmatpush.msra.mxu0 0.0
    %272 = vmatpush.msra.mxu0 0.0
    %273 = vmatpush.msra.mxu0 0.0
    %274 = vmatpush.msra.mxu0 0.0
    %275 = vmatpush.msra.mxu0 0.0
    %276 = vmatpush.msra.mxu0 0.0
    %277 = vmatpush.msra.mxu0 0.0
    %278 = vmatpush.msra.mxu0 %v258
    %279 = vmatmul.f32.gmra.mxu0 %v261
    %v280 = vpop.f32.mrf.mxu0
    %v281 = vadd.f32 0.0, %v280
    %282 = vdwg.mxu0
    %v283 = vld [vmem:[%s5] sm:$0xff]
    %284 = vrot.lane.b32.xlu0 %v143, 120
    %v285 = vpop.permute.xlu0 %284
    %286 = vrot.lane.b32.xlu0 %v143, 88
    %v287 = vpop.permute.xlu0 %286
    %v288 = vsel %vm157, %v285, 0
    %v290 = vsel %vm157, %v287, 0
    %292 = vmatpush.xpose.msra.mxu0 0.0
    %293 = vmatpush.xpose.msra.mxu0 0.0
    %294 = vmatpush.xpose.msra.mxu0 0.0
    %295 = vmatpush.xpose.msra.mxu0 0.0
    %296 = vmatpush.xpose.msra.mxu0 0.0
    %297 = vmatpush.xpose.msra.mxu0 0.0
    %298 = vmatpush.xpose.msra.mxu0 0.0
    %299 = vmatpush.xpose.msra.mxu0 0.0
    %300 = vmatpush.xpose.msra.mxu0 0.0
    %301 = vmatpush.xpose.msra.mxu0 0.0
    %302 = vmatpush.xpose.msra.mxu0 0.0
    %303 = vmatpush.xpose.msra.mxu0 0.0
    %304 = vmatpush.xpose.msra.mxu0 0.0
    %305 = vmatpush.xpose.msra.mxu0 0.0
    %306 = vmatpush.xpose.msra.mxu0 0.0
    %307 = vmatpush.xpose.msra.mxu0 %v290
    %308 = vmatmul.f32.gmra.mxu0 %v288
    %v309 = vpop.f32.mrf.mxu0
    %v310 = vadd.f32 %v153, %v309
    %311 = vdwg.mxu0
    %312 = vrot.lane.b32.xlu0 %v146, 120
    %v313 = vpop.permute.xlu0 %312
    %314 = vrot.lane.b32.xlu0 %v146, 88
    %v315 = vpop.permute.xlu0 %314
    %v316 = vsel %vm157, %v313, 0
    %v318 = vsel %vm157, %v315, 0
    %320 = vmatpush.xpose.msra.mxu0 0.0
    %321 = vmatpush.xpose.msra.mxu0 0.0
    %322 = vmatpush.xpose.msra.mxu0 0.0
    %323 = vmatpush.xpose.msra.mxu0 0.0
    %324 = vmatpush.xpose.msra.mxu0 0.0
    %325 = vmatpush.xpose.msra.mxu0 0.0
    %326 = vmatpush.xpose.msra.mxu0 0.0
    %327 = vmatpush.xpose.msra.mxu0 0.0
    %328 = vmatpush.xpose.msra.mxu0 0.0
    %329 = vmatpush.xpose.msra.mxu0 0.0
    %330 = vmatpush.xpose.msra.mxu0 0.0
    %331 = vmatpush.xpose.msra.mxu0 0.0
    %332 = vmatpush.xpose.msra.mxu0 0.0
    %333 = vmatpush.xpose.msra.mxu0 0.0
    %334 = vmatpush.xpose.msra.mxu0 0.0
    %335 = vmatpush.xpose.msra.mxu0 %v318
    %336 = vmatmul.f32.gmra.mxu0 %v316
    %v337 = vpop.f32.mrf.mxu0
    %v338 = vadd.f32 %v153, %v337
    %339 = vdwg.mxu0
    %v340 = vsel %vm157, %v310, -inf
    %341 = vmax.xlane.f32.xlu0 %v340
    %v342 = vpop.xlane.xlu0 %341
    %v343 = vsel %vm157, %v338, -inf
    %344 = vmax.xlane.f32.xlu0 %v343
    %v345 = vpop.xlane.xlu0 %344
    %v346 = vsub.f32 %v310, %v342
    %v347 = vsub.f32 %v338, %v345
    %v348 = vmul.f32 %v346, 1.442695
    %v349 = vpow.pop %v348
    %v350 = vmul.f32 %v347, 1.442695
    %v351 = vpow.pop %v350
    %v352 = vsel %vm157, %v349, 0.0
    %353 = vadd.xlane.f32.xlu0 %v352
    %v354 = vpop.xlane.xlu0 %353
    %v355 = vsel %vm157, %v351, 0.0
    %356 = vadd.xlane.f32.xlu0 %v355
    %v357 = vpop.xlane.xlu0 %356
    %v358 = vrcp.pop %v354
    %v359 = vrcp.pop %v357
    %v360 = vmul.f32 %v349, %v358
    %v361 = vmul.f32 %v351, %v359
    %362 = vrot.lane.b32.xlu0 %v143, 56
    %v363 = vpop.permute.xlu0 %362
    %v366 = vsel %vm157, %v360, 0
    %368 = vmatpush.msra.mxu0 0.0
    %369 = vmatpush.msra.mxu0 0.0
    %370 = vmatpush.msra.mxu0 0.0
    %371 = vmatpush.msra.mxu0 0.0
    %372 = vmatpush.msra.mxu0 0.0
    %373 = vmatpush.msra.mxu0 0.0
    %374 = vmatpush.msra.mxu0 0.0
    %375 = vmatpush.msra.mxu0 0.0
    %376 = vmatpush.msra.mxu0 0.0
    %377 = vmatpush.msra.mxu0 0.0
    %378 = vmatpush.msra.mxu0 0.0
    %379 = vmatpush.msra.mxu0 0.0
    %380 = vmatpush.msra.mxu0 0.0
    %381 = vmatpush.msra.mxu0 0.0
    %382 = vmatpush.msra.mxu0 0.0
    %383 = vmatpush.msra.mxu0 %v363
    %384 = vmatmul.f32.gmra.mxu0 %v366
    %v385 = vpop.f32.mrf.mxu0
    %v386 = vadd.f32 0.0, %v385
    %387 = vdwg.mxu0
    %388 = vrot.lane.b32.xlu0 %v146, 56
    %v389 = vpop.permute.xlu0 %388
    %v392 = vsel %vm157, %v361, 0
    %394 = vmatpush.msra.mxu0 0.0
    %395 = vmatpush.msra.mxu0 0.0
    %396 = vmatpush.msra.mxu0 0.0
    %397 = vmatpush.msra.mxu0 0.0
    %398 = vmatpush.msra.mxu0 0.0
    %399 = vmatpush.msra.mxu0 0.0
    %400 = vmatpush.msra.mxu0 0.0
    %401 = vmatpush.msra.mxu0 0.0
    %402 = vmatpush.msra.mxu0 0.0
    %403 = vmatpush.msra.mxu0 0.0
    %404 = vmatpush.msra.mxu0 0.0
    %405 = vmatpush.msra.mxu0 0.0
    %406 = vmatpush.msra.mxu0 0.0
    %407 = vmatpush.msra.mxu0 0.0
    %408 = vmatpush.msra.mxu0 0.0
    %409 = vmatpush.msra.mxu0 %v389
    %410 = vmatmul.f32.gmra.mxu0 %v392
    %v411 = vpop.f32.mrf.mxu0
    %v412 = vadd.f32 0.0, %v411
    %413 = vdwg.mxu0
    %v414 = vld [vmem:[%s5 + $0x8] sm:$0xff]
    %v416 = vsel %vm157, %v386, 0
    %v419 = vsel %vm157, %v412, 0
    %421 = vmatpush.msra.mxu0 0.0
    %422 = vmatpush.msra.mxu0 0.0
    %423 = vmatpush.msra.mxu0 0.0
    %424 = vmatpush.msra.mxu0 0.0
    %425 = vmatpush.msra.mxu0 0.0
    %426 = vmatpush.msra.mxu0 0.0
    %427 = vmatpush.msra.mxu0 0.0
    %428 = vmatpush.msra.mxu0 0.0
    %429 = vmatpush.msra.mxu0 0.0
    %430 = vmatpush.msra.mxu0 0.0
    %431 = vmatpush.msra.mxu0 0.0
    %432 = vmatpush.msra.mxu0 0.0
    %433 = vmatpush.msra.mxu0 0.0
    %434 = vmatpush.msra.mxu0 0.0
    %435 = vmatpush.msra.mxu0 0.0
    %436 = vmatpush.msra.mxu0 %v414
    %437 = vmatmul.f32.gmra.mxu0 %v416
    %v438 = vpop.f32.mrf.mxu0
    %v439 = vadd.f32 0.0, %v438
    %440 = vmatmul.f32.gmra.mxu0 %v419
    %v441 = vpop.f32.mrf.mxu0
    %v442 = vadd.f32 0.0, %v441
    %443 = vdwg.mxu0
    %v445 = vsel %vm157, %v255, 0
    %v448 = vsel %vm157, %v281, 0
    %450 = vmatpush.msra.mxu0 0.0
    %451 = vmatpush.msra.mxu0 0.0
    %452 = vmatpush.msra.mxu0 0.0
    %453 = vmatpush.msra.mxu0 0.0
    %454 = vmatpush.msra.mxu0 0.0
    %455 = vmatpush.msra.mxu0 0.0
    %456 = vmatpush.msra.mxu0 0.0
    %457 = vmatpush.msra.mxu0 0.0
    %458 = vmatpush.msra.mxu0 0.0
    %459 = vmatpush.msra.mxu0 0.0
    %460 = vmatpush.msra.mxu0 0.0
    %461 = vmatpush.msra.mxu0 0.0
    %462 = vmatpush.msra.mxu0 0.0
    %463 = vmatpush.msra.mxu0 0.0
    %464 = vmatpush.msra.mxu0 0.0
    %465 = vmatpush.msra.mxu0 %v283
    %466 = vmatmul.f32.gmra.mxu0 %v445
    %v467 = vpop.f32.mrf.mxu0
    %v468 = vadd.f32 %v439, %v467
    %469 = vmatmul.f32.gmra.mxu0 %v448
    %v470 = vpop.f32.mrf.mxu0
    %v471 = vadd.f32 %v442, %v470
    %472 = vdwg.mxu0
    %473 = vrot.lane.b32.xlu0 %v143, 112
    %v474 = vpop.permute.xlu0 %473
    %475 = vrot.lane.b32.xlu0 %v143, 80
    %v476 = vpop.permute.xlu0 %475
    %v477 = vsel %vm157, %v474, 0
    %v479 = vsel %vm157, %v476, 0
    %481 = vmatpush.xpose.msra.mxu0 0.0
    %482 = vmatpush.xpose.msra.mxu0 0.0
    %483 = vmatpush.xpose.msra.mxu0 0.0
    %484 = vmatpush.xpose.msra.mxu0 0.0
    %485 = vmatpush.xpose.msra.mxu0 0.0
    %486 = vmatpush.xpose.msra.mxu0 0.0
    %487 = vmatpush.xpose.msra.mxu0 0.0
    %488 = vmatpush.xpose.msra.mxu0 0.0
    %489 = vmatpush.xpose.msra.mxu0 0.0
    %490 = vmatpush.xpose.msra.mxu0 0.0
    %491 = vmatpush.xpose.msra.mxu0 0.0
    %492 = vmatpush.xpose.msra.mxu0 0.0
    %493 = vmatpush.xpose.msra.mxu0 0.0
    %494 = vmatpush.xpose.msra.mxu0 0.0
    %495 = vmatpush.xpose.msra.mxu0 0.0
    %496 = vmatpush.xpose.msra.mxu0 %v479
    %497 = vmatmul.f32.gmra.mxu0 %v477
    %v498 = vpop.f32.mrf.mxu0
    %v499 = vadd.f32 %v153, %v498
    %500 = vdwg.mxu0
    %501 = vrot.lane.b32.xlu0 %v146, 112
    %v502 = vpop.permute.xlu0 %501
    %503 = vrot.lane.b32.xlu0 %v146, 80
    %v504 = vpop.permute.xlu0 %503
    %v505 = vsel %vm157, %v502, 0
    %v507 = vsel %vm157, %v504, 0
    %509 = vmatpush.xpose.msra.mxu0 0.0
    %510 = vmatpush.xpose.msra.mxu0 0.0
    %511 = vmatpush.xpose.msra.mxu0 0.0
    %512 = vmatpush.xpose.msra.mxu0 0.0
    %513 = vmatpush.xpose.msra.mxu0 0.0
    %514 = vmatpush.xpose.msra.mxu0 0.0
    %515 = vmatpush.xpose.msra.mxu0 0.0
    %516 = vmatpush.xpose.msra.mxu0 0.0
    %517 = vmatpush.xpose.msra.mxu0 0.0
    %518 = vmatpush.xpose.msra.mxu0 0.0
    %519 = vmatpush.xpose.msra.mxu0 0.0
    %520 = vmatpush.xpose.msra.mxu0 0.0
    %521 = vmatpush.xpose.msra.mxu0 0.0
    %522 = vmatpush.xpose.msra.mxu0 0.0
    %523 = vmatpush.xpose.msra.mxu0 0.0
    %524 = vmatpush.xpose.msra.mxu0 %v507
    %525 = vmatmul.f32.gmra.mxu0 %v505
    %v526 = vpop.f32.mrf.mxu0
    %v527 = vadd.f32 %v153, %v526
    %528 = vdwg.mxu0
    %v529 = vsel %vm157, %v499, -inf
    %530 = vmax.xlane.f32.xlu0 %v529
    %v531 = vpop.xlane.xlu0 %530
    %v532 = vsel %vm157, %v527, -inf
    %533 = vmax.xlane.f32.xlu0 %v532
    %v534 = vpop.xlane.xlu0 %533
    %v535 = vsub.f32 %v499, %v531
    %v536 = vsub.f32 %v527, %v534
    %v537 = vmul.f32 %v535, 1.442695
    %v538 = vpow.pop %v537
    %v539 = vmul.f32 %v536, 1.442695
    %v540 = vpow.pop %v539
    %v541 = vsel %vm157, %v538, 0.0
    %542 = vadd.xlane.f32.xlu0 %v541
    %v543 = vpop.xlane.xlu0 %542
    %v544 = vsel %vm157, %v540, 0.0
    %545 = vadd.xlane.f32.xlu0 %v544
    %v546 = vpop.xlane.xlu0 %545
    %v547 = vrcp.pop %v543
    %v548 = vrcp.pop %v546
    %v549 = vmul.f32 %v538, %v547
    %v550 = vmul.f32 %v540, %v548
    %551 = vrot.lane.b32.xlu0 %v143, 48
    %v552 = vpop.permute.xlu0 %551
    %v555 = vsel %vm157, %v549, 0
    %557 = vmatpush.msra.mxu0 0.0
    %558 = vmatpush.msra.mxu0 0.0
    %559 = vmatpush.msra.mxu0 0.0
    %560 = vmatpush.msra.mxu0 0.0
    %561 = vmatpush.msra.mxu0 0.0
    %562 = vmatpush.msra.mxu0 0.0
    %563 = vmatpush.msra.mxu0 0.0
    %564 = vmatpush.msra.mxu0 0.0
    %565 = vmatpush.msra.mxu0 0.0
    %566 = vmatpush.msra.mxu0 0.0
    %567 = vmatpush.msra.mxu0 0.0
    %568 = vmatpush.msra.mxu0 0.0
    %569 = vmatpush.msra.mxu0 0.0
    %570 = vmatpush.msra.mxu0 0.0
    %571 = vmatpush.msra.mxu0 0.0
    %572 = vmatpush.msra.mxu0 %v552
    %573 = vmatmul.f32.gmra.mxu0 %v555
    %v574 = vpop.f32.mrf.mxu0
    %v575 = vadd.f32 0.0, %v574
    %576 = vdwg.mxu0
    %577 = vrot.lane.b32.xlu0 %v146, 48
    %v578 = vpop.permute.xlu0 %577
    %v581 = vsel %vm157, %v550, 0
    %583 = vmatpush.msra.mxu0 0.0
    %584 = vmatpush.msra.mxu0 0.0
    %585 = vmatpush.msra.mxu0 0.0
    %586 = vmatpush.msra.mxu0 0.0
    %587 = vmatpush.msra.mxu0 0.0
    %588 = vmatpush.msra.mxu0 0.0
    %589 = vmatpush.msra.mxu0 0.0
    %590 = vmatpush.msra.mxu0 0.0
    %591 = vmatpush.msra.mxu0 0.0
    %592 = vmatpush.msra.mxu0 0.0
    %593 = vmatpush.msra.mxu0 0.0
    %594 = vmatpush.msra.mxu0 0.0
    %595 = vmatpush.msra.mxu0 0.0
    %596 = vmatpush.msra.mxu0 0.0
    %597 = vmatpush.msra.mxu0 0.0
    %598 = vmatpush.msra.mxu0 %v578
    %599 = vmatmul.f32.gmra.mxu0 %v581
    %v600 = vpop.f32.mrf.mxu0
    %v601 = vadd.f32 0.0, %v600
    %602 = vdwg.mxu0
    %v603 = vld [vmem:[%s5 + $0x10] sm:$0xff]
    %v605 = vsel %vm157, %v575, 0
    %v608 = vsel %vm157, %v601, 0
    %610 = vmatpush.msra.mxu0 0.0
    %611 = vmatpush.msra.mxu0 0.0
    %612 = vmatpush.msra.mxu0 0.0
    %613 = vmatpush.msra.mxu0 0.0
    %614 = vmatpush.msra.mxu0 0.0
    %615 = vmatpush.msra.mxu0 0.0
    %616 = vmatpush.msra.mxu0 0.0
    %617 = vmatpush.msra.mxu0 0.0
    %618 = vmatpush.msra.mxu0 0.0
    %619 = vmatpush.msra.mxu0 0.0
    %620 = vmatpush.msra.mxu0 0.0
    %621 = vmatpush.msra.mxu0 0.0
    %622 = vmatpush.msra.mxu0 0.0
    %623 = vmatpush.msra.mxu0 0.0
    %624 = vmatpush.msra.mxu0 0.0
    %625 = vmatpush.msra.mxu0 %v603
    %626 = vmatmul.f32.gmra.mxu0 %v605
    %v627 = vpop.f32.mrf.mxu0
    %v628 = vadd.f32 0.0, %v627
    %629 = vmatmul.f32.gmra.mxu0 %v608
    %v630 = vpop.f32.mrf.mxu0
    %v631 = vadd.f32 0.0, %v630
    %632 = vdwg.mxu0
    %v633 = vadd.f32 %v468, %v628
    %v634 = vadd.f32 %v471, %v631
    %635 = vrot.lane.b32.xlu0 %v143, 104
    %v636 = vpop.permute.xlu0 %635
    %637 = vrot.lane.b32.xlu0 %v143, 72
    %v638 = vpop.permute.xlu0 %637
    %v639 = vsel %vm157, %v636, 0
    %v641 = vsel %vm157, %v638, 0
    %643 = vmatpush.xpose.msra.mxu0 0.0
    %644 = vmatpush.xpose.msra.mxu0 0.0
    %645 = vmatpush.xpose.msra.mxu0 0.0
    %646 = vmatpush.xpose.msra.mxu0 0.0
    %647 = vmatpush.xpose.msra.mxu0 0.0
    %648 = vmatpush.xpose.msra.mxu0 0.0
    %649 = vmatpush.xpose.msra.mxu0 0.0
    %650 = vmatpush.xpose.msra.mxu0 0.0
    %651 = vmatpush.xpose.msra.mxu0 0.0
    %652 = vmatpush.xpose.msra.mxu0 0.0
    %653 = vmatpush.xpose.msra.mxu0 0.0
    %654 = vmatpush.xpose.msra.mxu0 0.0
    %655 = vmatpush.xpose.msra.mxu0 0.0
    %656 = vmatpush.xpose.msra.mxu0 0.0
    %657 = vmatpush.xpose.msra.mxu0 0.0
    %658 = vmatpush.xpose.msra.mxu0 %v641
    %659 = vmatmul.f32.gmra.mxu0 %v639
    %v660 = vpop.f32.mrf.mxu0
    %v661 = vadd.f32 %v153, %v660
    %662 = vdwg.mxu0
    %663 = vrot.lane.b32.xlu0 %v146, 104
    %v664 = vpop.permute.xlu0 %663
    %665 = vrot.lane.b32.xlu0 %v146, 72
    %v666 = vpop.permute.xlu0 %665
    %v667 = vsel %vm157, %v664, 0
    %v669 = vsel %vm157, %v666, 0
    %671 = vmatpush.xpose.msra.mxu0 0.0
    %672 = vmatpush.xpose.msra.mxu0 0.0
    %673 = vmatpush.xpose.msra.mxu0 0.0
    %674 = vmatpush.xpose.msra.mxu0 0.0
    %675 = vmatpush.xpose.msra.mxu0 0.0
    %676 = vmatpush.xpose.msra.mxu0 0.0
    %677 = vmatpush.xpose.msra.mxu0 0.0
    %678 = vmatpush.xpose.msra.mxu0 0.0
    %679 = vmatpush.xpose.msra.mxu0 0.0
    %680 = vmatpush.xpose.msra.mxu0 0.0
    %681 = vmatpush.xpose.msra.mxu0 0.0
    %682 = vmatpush.xpose.msra.mxu0 0.0
    %683 = vmatpush.xpose.msra.mxu0 0.0
    %684 = vmatpush.xpose.msra.mxu0 0.0
    %685 = vmatpush.xpose.msra.mxu0 0.0
    %686 = vmatpush.xpose.msra.mxu0 %v669
    %687 = vmatmul.f32.gmra.mxu0 %v667
    %v688 = vpop.f32.mrf.mxu0
    %v689 = vadd.f32 %v153, %v688
    %690 = vdwg.mxu0
    %v691 = vsel %vm157, %v661, -inf
    %692 = vmax.xlane.f32.xlu0 %v691
    %v693 = vpop.xlane.xlu0 %692
    %v694 = vsel %vm157, %v689, -inf
    %695 = vmax.xlane.f32.xlu0 %v694
    %v696 = vpop.xlane.xlu0 %695
    %v697 = vsub.f32 %v661, %v693
    %v698 = vsub.f32 %v689, %v696
    %v699 = vmul.f32 %v697, 1.442695
    %v700 = vpow.pop %v699
    %v701 = vmul.f32 %v698, 1.442695
    %v702 = vpow.pop %v701
    %v703 = vsel %vm157, %v700, 0.0
    %704 = vadd.xlane.f32.xlu0 %v703
    %v705 = vpop.xlane.xlu0 %704
    %v706 = vsel %vm157, %v702, 0.0
    %707 = vadd.xlane.f32.xlu0 %v706
    %v708 = vpop.xlane.xlu0 %707
    %v709 = vrcp.pop %v705
    %v710 = vrcp.pop %v708
    %v711 = vmul.f32 %v700, %v709
    %v712 = vmul.f32 %v702, %v710
    %713 = vrot.lane.b32.xlu0 %v143, 40
    %v714 = vpop.permute.xlu0 %713
    %v717 = vsel %vm157, %v711, 0
    %719 = vmatpush.msra.mxu0 0.0
    %720 = vmatpush.msra.mxu0 0.0
    %721 = vmatpush.msra.mxu0 0.0
    %722 = vmatpush.msra.mxu0 0.0
    %723 = vmatpush.msra.mxu0 0.0
    %724 = vmatpush.msra.mxu0 0.0
    %725 = vmatpush.msra.mxu0 0.0
    %726 = vmatpush.msra.mxu0 0.0
    %727 = vmatpush.msra.mxu0 0.0
    %728 = vmatpush.msra.mxu0 0.0
    %729 = vmatpush.msra.mxu0 0.0
    %730 = vmatpush.msra.mxu0 0.0
    %731 = vmatpush.msra.mxu0 0.0
    %732 = vmatpush.msra.mxu0 0.0
    %733 = vmatpush.msra.mxu0 0.0
    %734 = vmatpush.msra.mxu0 %v714
    %735 = vmatmul.f32.gmra.mxu0 %v717
    %v736 = vpop.f32.mrf.mxu0
    %v737 = vadd.f32 0.0, %v736
    %738 = vdwg.mxu0
    %739 = vrot.lane.b32.xlu0 %v146, 40
    %v740 = vpop.permute.xlu0 %739
    %v743 = vsel %vm157, %v712, 0
    %745 = vmatpush.msra.mxu0 0.0
    %746 = vmatpush.msra.mxu0 0.0
    %747 = vmatpush.msra.mxu0 0.0
    %748 = vmatpush.msra.mxu0 0.0
    %749 = vmatpush.msra.mxu0 0.0
    %750 = vmatpush.msra.mxu0 0.0
    %751 = vmatpush.msra.mxu0 0.0
    %752 = vmatpush.msra.mxu0 0.0
    %753 = vmatpush.msra.mxu0 0.0
    %754 = vmatpush.msra.mxu0 0.0
    %755 = vmatpush.msra.mxu0 0.0
    %756 = vmatpush.msra.mxu0 0.0
    %757 = vmatpush.msra.mxu0 0.0
    %758 = vmatpush.msra.mxu0 0.0
    %759 = vmatpush.msra.mxu0 0.0
    %760 = vmatpush.msra.mxu0 %v740
    %761 = vmatmul.f32.gmra.mxu0 %v743
    %v762 = vpop.f32.mrf.mxu0
    %v763 = vadd.f32 0.0, %v762
    %764 = vdwg.mxu0
    %v765 = vld [vmem:[%s5 + $0x18] sm:$0xff]
    %v767 = vsel %vm157, %v737, 0
    %v770 = vsel %vm157, %v763, 0
    %772 = vmatpush.msra.mxu0 0.0
    %773 = vmatpush.msra.mxu0 0.0
    %774 = vmatpush.msra.mxu0 0.0
    %775 = vmatpush.msra.mxu0 0.0
    %776 = vmatpush.msra.mxu0 0.0
    %777 = vmatpush.msra.mxu0 0.0
    %778 = vmatpush.msra.mxu0 0.0
    %779 = vmatpush.msra.mxu0 0.0
    %780 = vmatpush.msra.mxu0 0.0
    %781 = vmatpush.msra.mxu0 0.0
    %782 = vmatpush.msra.mxu0 0.0
    %783 = vmatpush.msra.mxu0 0.0
    %784 = vmatpush.msra.mxu0 0.0
    %785 = vmatpush.msra.mxu0 0.0
    %786 = vmatpush.msra.mxu0 0.0
    %787 = vmatpush.msra.mxu0 %v765
    %788 = vmatmul.f32.gmra.mxu0 %v767
    %v789 = vpop.f32.mrf.mxu0
    %v790 = vadd.f32 0.0, %v789
    %791 = vmatmul.f32.gmra.mxu0 %v770
    %v792 = vpop.f32.mrf.mxu0
    %v793 = vadd.f32 0.0, %v792
    %794 = vdwg.mxu0
    %v795 = vadd.f32 %v633, %v790
    %v796 = vadd.f32 %v634, %v793
    %v797 = vadd.f32 %v45, %v795
    %v798 = vadd.f32 %v46, %v796
    %v799 = vld [vmem:[%s6] sm:$0x1]
    %v801 = vperm.slane %v799, 0
    %v803 = vadd.f32 %v797, %v801
    %v804 = vadd.f32 %v798, %v801
    %v805 = vld [vmem:[%s7] sm:$0x1]
    %v806 = vld [vmem:[%s8] sm:$0x1]
    %v807 = vsel %vm49, %v803, 0.0
    %808 = vadd.xlane.f32.xlu0 %v807
    %v809 = vpop.xlane.xlu0 %808
    %v810 = vsel %vm49, %v804, 0.0
    %811 = vadd.xlane.f32.xlu0 %v810
    %v812 = vpop.xlane.xlu0 %811
    %v813 = vmul.f32 %v809, %v62
    %v814 = vmul.f32 %v812, %v62
    %v815 = vsub.f32 %v803, %v813
    %v816 = vsub.f32 %v804, %v814
    %v817 = vmul.f32 %v815, %v815
    %v818 = vmul.f32 %v816, %v816
    %v819 = vsel %vm49, %v817, 0.0
    %820 = vadd.xlane.f32.xlu0 %v819
    %v821 = vpop.xlane.xlu0 %820
    %v822 = vsel %vm49, %v818, 0.0
    %823 = vadd.xlane.f32.xlu0 %v822
    %v824 = vpop.xlane.xlu0 %823
    %v825 = vmul.f32 %v821, %v62
    %v826 = vmul.f32 %v824, %v62
    %v827 = vadd.f32 %v825, 1e-05
    %v828 = vadd.f32 %v826, 1e-05
    %v829 = vrsqrt.pop %v827
    %v830 = vmul.f32 %v829, %v827
    %v831 = vmul.f32 %v830, %v829
    %v832 = vmul.f32 0.5, %v831
    %v833 = vsub.f32 1.5, %v832
    %v834 = vmul.f32 %v829, %v833
    %vm835 = vweird.f32 %v827
    %vm836 = vweird.f32 %v829
    %vm837 = vmor %vm835, %vm836
    %v838 = vsel %vm837, %v829, %v834
    %v839 = vrsqrt.pop %v828
    %v840 = vmul.f32 %v839, %v828
    %v841 = vmul.f32 %v840, %v839
    %v842 = vmul.f32 0.5, %v841
    %v843 = vsub.f32 1.5, %v842
    %v844 = vmul.f32 %v839, %v843
    %vm845 = vweird.f32 %v828
    %vm846 = vweird.f32 %v839
    %vm847 = vmor %vm845, %vm846
    %v848 = vsel %vm847, %v839, %v844
    %v849 = vmul.f32 %v815, %v838
    %v850 = vmul.f32 %v816, %v848
    %v852 = vperm.slane %v805, 0
    %v854 = vmul.f32 %v849, %v852
    %v855 = vmul.f32 %v850, %v852
    %v857 = vperm.slane %v806, 0
    %v859 = vadd.f32 %v854, %v857
    %v860 = vadd.f32 %v855, %v857
    %v861 = vld [vmem:[%s9] sm:$0xff]
    %v862 = vld [vmem:[%s9 + $0x8] sm:$0xff]
    %v863 = vld [vmem:[%s9 + $0x10] sm:$0xff]
    %v864 = vld [vmem:[%s9 + $0x18] sm:$0xff]
    %v865 = vld [vmem:[%s9 + $0x20] sm:$0xff]
    %v866 = vld [vmem:[%s9 + $0x28] sm:$0xff]
    %v867 = vld [vmem:[%s9 + $0x30] sm:$0xff]
    %v868 = vld [vmem:[%s9 + $0x38] sm:$0xff]
    %v869 = vld [vmem:[%s10] sm:$0x3]
    %v871 = vperm.slane %v869, 0
    %v872 = vperm.slane %v869, 1
    %v876 = vsel %vm49, %v859, 0
    %v879 = vsel %vm49, %v860, 0
    %881 = vmatpush.msra.mxu0 0.0
    %882 = vmatpush.msra.mxu0 0.0
    %883 = vmatpush.msra.mxu0 0.0
    %884 = vmatpush.msra.mxu0 0.0
    %885 = vmatpush.msra.mxu0 0.0
    %886 = vmatpush.msra.mxu0 0.0
    %887 = vmatpush.msra.mxu0 0.0
    %888 = vmatpush.msra.mxu0 0.0
    %889 = vmatpush.msra.mxu0 0.0
    %890 = vmatpush.msra.mxu0 0.0
    %891 = vmatpush.msra.mxu0 0.0
    %892 = vmatpush.msra.mxu0 0.0
    %893 = vmatpush.msra.mxu0 %v867
    %894 = vmatpush.msra.mxu0 %v865
    %895 = vmatpush.msra.mxu0 %v863
    %896 = vmatpush.msra.mxu0 %v861
    %897 = vmatmul.f32.gmra.mxu0 %v876
    %v898 = vpop.f32.mrf.mxu0
    %v899 = vadd.f32 %v871, %v898
    %900 = vmatmul.f32.gmra.mxu0 %v879
    %v901 = vpop.f32.mrf.mxu0
    %v902 = vadd.f32 %v871, %v901
    %903 = vdwg.mxu0
    %904 = vmatpush.msra.mxu0 0.0
    %905 = vmatpush.msra.mxu0 0.0
    %906 = vmatpush.msra.mxu0 0.0
    %907 = vmatpush.msra.mxu0 0.0
    %908 = vmatpush.msra.mxu0 0.0
    %909 = vmatpush.msra.mxu0 0.0
    %910 = vmatpush.msra.mxu0 0.0
    %911 = vmatpush.msra.mxu0 0.0
    %912 = vmatpush.msra.mxu0 0.0
    %913 = vmatpush.msra.mxu0 0.0
    %914 = vmatpush.msra.mxu0 0.0
    %915 = vmatpush.msra.mxu0 0.0
    %916 = vmatpush.msra.mxu0 %v868
    %917 = vmatpush.msra.mxu0 %v866
    %918 = vmatpush.msra.mxu0 %v864
    %919 = vmatpush.msra.mxu0 %v862
    %920 = vmatmul.f32.gmra.mxu0 %v876
    %v921 = vpop.f32.mrf.mxu0
    %v922 = vadd.f32 %v872, %v921
    %923 = vmatmul.f32.gmra.mxu0 %v879
    %v924 = vpop.f32.mrf.mxu0
    %v925 = vadd.f32 %v872, %v924
    %926 = vdwg.mxu0
    %v927 = vxor.u32 %v899, 2147483648
    %v928 = vxor.u32 %v902, 2147483648
    %v929 = vmul.f32 %v927, 1.442695
    %v930 = vpow.pop %v929
    %v931 = vmul.f32 %v928, 1.442695
    %v932 = vpow.pop %v931
    %v933 = vadd.f32 %v930, 1.0
    %v934 = vadd.f32 %v932, 1.0
    %v935 = vrcp.pop %v933
    %v936 = vmul.f32 %v933, %v935
    %v937 = vsub.f32 1.0, %v936
    %v938 = vmul.f32 %v935, %v937
    %v939 = vadd.f32 %v935, %v938
    %vm940 = vweird.f32 %v933
    %vm941 = vweird.f32 %v935
    %vm942 = vmor %vm940, %vm941
    %v943 = vsel %vm942, %v935, %v939
    %v944 = vand.u32 2147483647, %v933
    %vm945 = vcmp.eq.f32.partialorder %v944, 8.507059e+37
    %v946 = vand.u32 %v933, 2147483648
    %v947 = vor.u32 1.1754944e-38, %v946
    %v948 = vsel %vm945, %v947, %v943
    %v949 = vmul.f32 1.0, %v948
    %v950 = vrcp.pop %v934
    %v951 = vmul.f32 %v934, %v950
    %v952 = vsub.f32 1.0, %v951
    %v953 = vmul.f32 %v950, %v952
    %v954 = vadd.f32 %v950, %v953
    %vm955 = vweird.f32 %v934
    %vm956 = vweird.f32 %v950
    %vm957 = vmor %vm955, %vm956
    %v958 = vsel %vm957, %v950, %v954
    %v959 = vand.u32 2147483647, %v934
    %vm960 = vcmp.eq.f32.partialorder %v959, 8.507059e+37
    %v961 = vand.u32 %v934, 2147483648
    %v962 = vor.u32 1.1754944e-38, %v961
    %v963 = vsel %vm960, %v962, %v958
    %v964 = vmul.f32 1.0, %v963
    %v965 = vmul.f32 %v899, %v949
    %v966 = vmul.f32 %v902, %v964
    %v967 = vmul.f32 %v965, %v922
    %v968 = vmul.f32 %v966, %v925
    %v969 = vld [vmem:[%s11] sm:$0xff]
    %v970 = vld [vmem:[%s11 + $0x8] sm:$0xff]
    %v971 = vld [vmem:[%s11 + $0x10] sm:$0xff]
    %v972 = vld [vmem:[%s11 + $0x18] sm:$0xff]
    %v973 = vld [vmem:[%s11 + $0x20] sm:$0xff]
    %v974 = vld [vmem:[%s11 + $0x28] sm:$0xff]
    %v975 = vld [vmem:[%s11 + $0x30] sm:$0xff]
    %v976 = vld [vmem:[%s11 + $0x38] sm:$0xff]
    %v977 = vld [vmem:[%s11 + $0x40] sm:$0xff]
    %v978 = vld [vmem:[%s11 + $0x48] sm:$0xff]
    %v979 = vld [vmem:[%s11 + $0x50] sm:$0xff]
    %v980 = vld [vmem:[%s11 + $0x58] sm:$0xff]
    %v981 = vld [vmem:[%s11 + $0x60] sm:$0xff]
    %v982 = vld [vmem:[%s11 + $0x68] sm:$0xff]
    %v983 = vld [vmem:[%s11 + $0x70] sm:$0xff]
    %v984 = vld [vmem:[%s11 + $0x78] sm:$0xff]
    %v985 = vld [vmem:[%s12] sm:$0x1]
    %v987 = vperm.slane %v985, 0
    %989 = vmatpush.msra.mxu0 %v984
    %990 = vmatpush.msra.mxu0 %v983
    %991 = vmatpush.msra.mxu0 %v982
    %992 = vmatpush.msra.mxu0 %v981
    %993 = vmatpush.msra.mxu0 %v980
    %994 = vmatpush.msra.mxu0 %v979
    %995 = vmatpush.msra.mxu0 %v978
    %996 = vmatpush.msra.mxu0 %v977
    %997 = vmatpush.msra.mxu0 %v976
    %998 = vmatpush.msra.mxu0 %v975
    %999 = vmatpush.msra.mxu0 %v974
    %1000 = vmatpush.msra.mxu0 %v973
    %1001 = vmatpush.msra.mxu0 %v972
    %1002 = vmatpush.msra.mxu0 %v971
    %1003 = vmatpush.msra.mxu0 %v970
    %1004 = vmatpush.msra.mxu0 %v969
    %1005 = vmatmul.f32.gmra.mxu0 %v967
    %v1006 = vpop.f32.mrf.mxu0
    %v1007 = vadd.f32 %v987, %v1006
    %1008 = vmatmul.f32.gmra.mxu0 %v968
    %v1009 = vpop.f32.mrf.mxu0
    %v1010 = vadd.f32 %v987, %v1009
    %1011 = vdwg.mxu0
    %v1012 = vadd.f32 %v803, %v1007
    %v1013 = vadd.f32 %v804, %v1010
    %1014 = vst.msk [vmem:[#allocation2] sm:$0xff] %vm49, %v1012
    %1015 = vst.msk [vmem:[#allocation2 + $0x8] sm:$0xff] %vm49, %v1013
    // Predicated region
    $region54: #{full_attention_layer.1} parent=1 // pred_check
      _
    $region55: #{full_attention_layer.1} parent=1 // pred_check_branch
      %1017 = sbr.rel (0) target = $region57
    $region56: #{full_attention_layer.1} parent=1 // pred_region
      %1019 = vsyncadd [#allocation3], 0
      %s1020 = sshll.u32 [#allocation2], 4
      %s1021 = int_to_ptr.vmem [resolvable:$true] %s1020
      %s1022 = sshll.u32 %s13, 4
      %s1023 = int_to_ptr.hbm [resolvable:$true] %s1022
      %1028 = dma.vmem_to_hbm [thread:$0]  %s1021, 256, %s1023, [#allocation3], 128, 128, 8
    $region57: #{full_attention_layer.1} parent=1 // pred_fallthru
      _
    // Predicated region
    $region58: #{full_attention_layer.1} parent=1 // pred_check
      _
    $region59: #{full_attention_layer.1} parent=1 // pred_check_branch
      %1030 = sbr.rel (0) target = $region61
    $region60: #{full_attention_layer.1} parent=1 // pred_region
      %1032 = dma.done [#allocation3], 256
    $region61: #{full_attention_layer.1} parent=1 // pred_fallthru
      _
    %1033 = vsyncpa [#allocation3], 1

</llo_original>
